<compile_context>
chip_gen: v7x
topology: tpu7x:2x2x1
jax: 0.10.0
libtpu: 0.0.40
codegen_flags: <defaults>
</compile_context>

<pallas_src>
import functools
import math

import jax
import jax.numpy as jnp
from jax.experimental import pallas as pl
from jax.experimental.pallas import tpu as pltpu


# ------------------------------ Fused MHA kernel ---------------------------- #

def _mha_kernel(xq_ref, xk_ref, xv_ref, wq_ref, wk_ref, wv_ref, wo_ref, o_ref,
                q_ref, kc_ref, vc_ref, acc_ref, m_ref, l_ref, *, n_heads):
    f32 = jnp.float32
    cdt = q_ref.dtype                      # compute (MXU operand) dtype
    D = q_ref.shape[-1]
    d_k = D // n_heads
    kv_tile = xk_ref.shape[0]

    jq = pl.program_id(1)                  # query-tile index within the group
    t = pl.program_id(2)                   # K/V chunk index (online-softmax axis)
    n_kvt = pl.num_programs(2)

    kv_start = pl.multiple_of(t * kv_tile, 8)

    # ---- per-group projected K/V cache: project chunk t only at jq == 0 ----
    @pl.when(jq == 0)
    def _project_kv_chunk():
        kc_ref[pl.ds(kv_start, kv_tile), :] = jnp.dot(
            xk_ref[...], wk_ref[...], preferred_element_type=f32).astype(cdt)
        vc_ref[pl.ds(kv_start, kv_tile), :] = jnp.dot(
            xv_ref[...], wv_ref[...], preferred_element_type=f32).astype(cdt)

    # ---- per-(group, query-tile) init: project Q tile (scale folded into WqT
    #      on the host) and reset the online-softmax running state -----------
    @pl.when(t == 0)
    def _init():
        q_ref[...] = jnp.dot(xq_ref[...], wq_ref[...],
                             preferred_element_type=f32).astype(cdt)
        acc_ref[...] = jnp.zeros_like(acc_ref)
        m_ref[...] = jnp.full_like(m_ref, -jnp.inf)
        l_ref[...] = jnp.zeros_like(l_ref)

    q = q_ref[...]                                           # (tq, D) cdt
    k_chunk = kc_ref[pl.ds(kv_start, kv_tile), :]            # (tkv, D) cdt
    v_chunk = vc_ref[pl.ds(kv_start, kv_tile), :]            # (tkv, D) cdt

    # ---- per-head online-softmax update -------------------------------------
    for h in range(n_heads):
        band = slice(h * d_k, (h + 1) * d_k)
        s = jax.lax.dot_general(q[:, band], k_chunk[:, band],
                                (((1,), (1,)), ((), ())),
                                preferred_element_type=f32)  # (tq, tkv) f32
        m_prev = m_ref[:, h:h + 1]
        l_prev = l_ref[:, h:h + 1]
        m_new = jnp.maximum(m_prev, jnp.max(s, axis=-1, keepdims=True))
        alpha = jnp.exp(m_prev - m_new)
        p = jnp.exp(s - m_new)                               # f32 softmax math
        l_ref[:, h:h + 1] = alpha * l_prev + jnp.sum(p, axis=-1, keepdims=True)
        acc_ref[:, band] = alpha * acc_ref[:, band] + jnp.dot(
            p.astype(cdt), v_chunk[:, band], preferred_element_type=f32)
        m_ref[:, h:h + 1] = m_new

    # ---- epilogue: normalize (post-PV), Wo projection, residual, store ------
    @pl.when(t == n_kvt - 1)
    def _finalize():
        l = l_ref[...]                                       # (tq, n_heads)
        inv = pl.reciprocal(l, approx=True)
        inv = inv * (2.0 - l * inv)                          # one Newton step
        for h in range(n_heads):
            band = slice(h * d_k, (h + 1) * d_k)
            acc_ref[:, band] = acc_ref[:, band] * inv[:, h:h + 1]
        ctx = acc_ref[...].astype(cdt)                       # (tq, D), lane-dense
        out = jnp.dot(ctx, wo_ref[...], preferred_element_type=f32)
        out = out + xq_ref[...].astype(f32)  # residual = same flat rows as the query tile
        o_ref[...] = out.astype(o_ref.dtype)


# ------------------------------ Sizing helpers ------------------------------ #

def _tpu_vmem_capacity_bytes():
    """Per-core physical VMEM (generation aware) with a conservative fallback."""
    try:
        info = pltpu.get_tpu_info()
        for attr in ("vmem_capacity_bytes", "vmem_bytes"):
            cap = getattr(info, attr, None)
            if cap:
                return int(cap)
    except Exception:
        pass
    return 64 * 1024 * 1024   # v7x-sized fallback (smallest current generation)


def _pick_tile(S, cap_rows):
    """Largest multiple-of-8 divisor of S that is <= cap_rows (or S itself)."""
    cap_rows = max(8, (int(cap_rows) // 8) * 8)
    if S <= cap_rows:
        return S
    best = 8
    t = 16
    while t <= cap_rows:
        if S % t == 0:
            best = t
        t += 8
    return best


# ------------------------------ Module forward ------------------------------ #

def multi_head_attention(Q, K, V, Wq, Wk, Wv, Wo, n_heads, *,
                         q_tile=None, kv_tile=None, compute_dtype=None):
    S, B, D = Q.shape
    if D % n_heads != 0:
        raise ValueError("d_model must be divisible by n_heads")
    d_k = D // n_heads
    M = S * B
    cdt = jnp.dtype(compute_dtype) if compute_dtype is not None else jnp.dtype(Q.dtype)
    scale = 1.0 / math.sqrt(d_k)

    # --- generation / VMEM aware tile selection ------------------------------
    vmem_cap = _tpu_vmem_capacity_bytes()
    itemsize = cdt.itemsize
    out_itemsize = jnp.dtype(Q.dtype).itemsize
    if S % 8 != 0:
        if B != 1:
            raise ValueError("kernel requires S % 8 == 0 when B > 1")
        q_tile = kv_tile = S        # untiled fallback (block shape == full dims)
    else:
        # Rough per-row VMEM cost of q-side state (double-buffered xq & out
        # blocks + q/acc scratch) and of the kv-side chunk blocks.
        q_row_bytes = D * (3 * itemsize + 2 * out_itemsize + 4)
        kv_row_bytes = D * 4 * itemsize
        if q_tile is None:
            q_tile = _pick_tile(S, min(512, (vmem_cap // 6) // q_row_bytes))
        if kv_tile is None:
            kv_tile = _pick_tile(S, min(1024, (vmem_cap // 8) // kv_row_bytes))
    if S % q_tile or S % kv_tile:
        raise ValueError("q_tile/kv_tile must divide the sequence length S")
    if (q_tile % 8 or kv_tile % 8) and not (B == 1 and q_tile == S and kv_tile == S):
        raise ValueError("q_tile/kv_tile must be multiples of 8")
    n_qt = S // q_tile
    n_kvt = S // kv_tile

    # --- host-side layout prep (free views + tiny weight transposes) ---------
    # PyTorch's flat-buffer .view() head split: attention group g == flat rows
    # [g*S, (g+1)*S) of the row-major (S*B, D) slab; residual row i == Q-flat
    # row i.
    Qf = Q.reshape(M, D).astype(cdt)
    Kf = K.reshape(M, D).astype(cdt)
    Vf = V.reshape(M, D).astype(cdt)

    # nn.Linear weights are (out, in); the kernel consumes x @ W^T.  Fold the
    # 1/sqrt(d_k) softmax scale into WqT once on the host.
    WqT = (Wq.T * scale).astype(cdt)
    WkT = Wk.T.astype(cdt)
    WvT = Wv.T.astype(cdt)
    WoT = Wo.T.astype(cdt)

    kernel = functools.partial(_mha_kernel, n_heads=n_heads)

    def kv_index_map(g, jq, t):
        # Raw K/V rows are only consumed at jq == 0 (they are projected into
        # the VMEM cache there); for jq > 0 keep the block index constant so
        # the pipeline elides the redundant HBM->VMEM copies.
        return (g * n_kvt + jnp.where(jq == 0, t, 0), 0)

    vmem_limit = int(min(max(vmem_cap - 32 * 1024 * 1024, 32 * 1024 * 1024),
                         96 * 1024 * 1024))

    out_flat = pl.pallas_call(
        kernel,
        out_shape=jax.ShapeDtypeStruct((M, D), Q.dtype),
        grid_spec=pltpu.PrefetchScalarGridSpec(
            num_scalar_prefetch=0,
            grid=(B, n_qt, n_kvt),
            in_specs=[
                # queries (+ residual rows): rows [g*S + jq*q_tile, ...)
                pl.BlockSpec((q_tile, D), lambda g, jq, t: (g * n_qt + jq, 0)),
                # raw K / V rows of the current group's chunk t
                pl.BlockSpec((kv_tile, D), kv_index_map),
                pl.BlockSpec((kv_tile, D), kv_index_map),
                # weights: constant index map -> fetched once, VMEM-resident
                pl.BlockSpec((D, D), lambda g, jq, t: (0, 0)),
                pl.BlockSpec((D, D), lambda g, jq, t: (0, 0)),
                pl.BlockSpec((D, D), lambda g, jq, t: (0, 0)),
                pl.BlockSpec((D, D), lambda g, jq, t: (0, 0)),
            ],
            out_specs=pl.BlockSpec((q_tile, D), lambda g, jq, t: (g * n_qt + jq, 0)),
            scratch_shapes=[
                pltpu.VMEM((q_tile, D), cdt),                 # projected Q tile
                pltpu.VMEM((S, D), cdt),                      # projected K cache (group)
                pltpu.VMEM((S, D), cdt),                      # projected V cache (group)
                pltpu.VMEM((q_tile, D), jnp.float32),         # online-softmax accumulator
                pltpu.VMEM((q_tile, n_heads), jnp.float32),   # running row max
                pltpu.VMEM((q_tile, n_heads), jnp.float32),   # running row sum
            ],
        ),
        compiler_params=pltpu.CompilerParams(
            # g shards across TensorCores; jq/t must stay sequential so the
            # projected-K/V cache and online-softmax scratch legally persist.
            dimension_semantics=("parallel", "arbitrary", "arbitrary"),
            vmem_limit_bytes=vmem_limit,
        ),
    )(Qf, Kf, Vf, WqT, WkT, WvT, WoT)

    # PyTorch: .view(-1, batch, H*d_v) reinterprets the (B, S)-ordered flat
    # rows as (S, B, D) — a free reshape of the flat output buffer.
    return out_flat.reshape(S, B, D)


# --------------------------------- Reference -------------------------------- #

def multi_head_attention_ref(Q, K, V, Wq, Wk, Wv, Wo, n_heads):
    S, B, D = Q.shape
    d_k = D // n_heads
    q = (Q.reshape(S * B, D) @ Wq.T).reshape(B, S, n_heads, d_k).transpose(0, 2, 1, 3)
    k = (K.reshape(S * B, D) @ Wk.T).reshape(B, S, n_heads, d_k).transpose(0, 2, 1, 3)
    v = (V.reshape(S * B, D) @ Wv.T).reshape(B, S, n_heads, d_k).transpose(0, 2, 1, 3)
    s = jnp.einsum("bhqd,bhkd->bhqk", q, k) / jnp.sqrt(jnp.float32(d_k))
    p = jax.nn.softmax(s, axis=-1)
    o = jnp.einsum("bhqk,bhkd->bhqd", p, v)
    o = o.transpose(0, 2, 1, 3).reshape(S * B, D)
    return (o @ Wo.T + Q.reshape(S * B, D)).reshape(S, B, D)


# ----------------------------------- Main ----------------------------------- #

if __name__ == "__main__":
    def make_case(key, S, B, d_model):
        kq, kk, kv, k1, k2, k3, k4 = jax.random.split(key, 7)
        bound = 1.0 / math.sqrt(d_model)
        Wq = jax.random.uniform(k1, (d_model, d_model), jnp.float32, -bound, bound)
        Wk = jax.random.uniform(k2, (d_model, d_model), jnp.float32, -bound, bound)
        Wv = jax.random.uniform(k3, (d_model, d_model), jnp.float32, -bound, bound)
        Wo = jax.random.uniform(k4, (d_model, d_model), jnp.float32, -bound, bound)
        Q = jax.random.normal(kq, (S, B, d_model), jnp.float32)
        K = jax.random.normal(kk, (S, B, d_model), jnp.float32)
        V = jax.random.normal(kv, (S, B, d_model), jnp.float32)
        return Q, K, V, Wq, Wk, Wv, Wo

    root = jax.random.PRNGKey(0)
    key1, key2 = jax.random.split(root)
    d_model, n_heads = 32, 4

    # 1) Tiny single-tile case (module's nominal shapes), f32 compute.
    S, B = 8, 2
    Q, K, V, Wq, Wk, Wv, Wo = make_case(key1, S, B, d_model)
    out = jax.block_until_ready(multi_head_attention(Q, K, V, Wq, Wk, Wv, Wo, n_heads))
    ref = multi_head_attention_ref(Q, K, V, Wq, Wk, Wv, Wo, n_heads)
    assert out.shape == (S, B, d_model)
    assert jnp.allclose(out, ref, atol=2e-4, rtol=2e-4), (
        f"f32 single-tile mismatch: {jnp.max(jnp.abs(out - ref))}")

    # 2) Multi-tile case: exercises the per-group projected-K/V cache (jq axis)
    #    and the online-softmax K/V chunking (t axis).
    S2, B2 = 64, 2
    Q2, K2, V2, Wq2, Wk2, Wv2, Wo2 = make_case(key2, S2, B2, d_model)
    out2 = jax.block_until_ready(
        multi_head_attention(Q2, K2, V2, Wq2, Wk2, Wv2, Wo2, n_heads,
                             q_tile=16, kv_tile=16))
    ref2 = multi_head_attention_ref(Q2, K2, V2, Wq2, Wk2, Wv2, Wo2, n_heads)
    assert jnp.allclose(out2, ref2, atol=1e-3, rtol=1e-3), (
        f"f32 multi-tile mismatch: {jnp.max(jnp.abs(out2 - ref2))}")

    # 3) bf16 MXU-operand path (review item), f32 accumulation, looser tolerance.
    out3 = jax.block_until_ready(
        multi_head_attention(Q, K, V, Wq, Wk, Wv, Wo, n_heads,
                             compute_dtype=jnp.bfloat16))
    assert jnp.allclose(out3, ref, atol=5e-2, rtol=5e-2), (
        f"bf16 mismatch: {jnp.max(jnp.abs(out3 - ref))}")

    print("KERNEL_OK")
</pallas_src>

<mosaic_0001>
module attributes {stable_mosaic.version = 11 : i64} {
  func.func @_mha_kernel(%arg0: i32, %arg1: i32, %arg2: i32, %arg3: memref<8x32xf32, #tpu.memory_space<vmem>>, %arg4: memref<8x32xf32, #tpu.memory_space<vmem>>, %arg5: memref<8x32xf32, #tpu.memory_space<vmem>>, %arg6: memref<32x32xf32, #tpu.memory_space<vmem>>, %arg7: memref<32x32xf32, #tpu.memory_space<vmem>>, %arg8: memref<32x32xf32, #tpu.memory_space<vmem>>, %arg9: memref<32x32xf32, #tpu.memory_space<vmem>>, %arg10: memref<8x32xf32, #tpu.memory_space<vmem>>, %arg11: memref<8x32xf32, #tpu.memory_space<vmem>>, %arg12: memref<8x32xf32, #tpu.memory_space<vmem>>, %arg13: memref<8x32xf32, #tpu.memory_space<vmem>>, %arg14: memref<8x32xf32, #tpu.memory_space<vmem>>, %arg15: memref<8x4xf32, #tpu.memory_space<vmem>>, %arg16: memref<8x4xf32, #tpu.memory_space<vmem>>) attributes {dimension_semantics = [#tpu.dimension_semantics<parallel>, #tpu.dimension_semantics<arbitrary>, #tpu.dimension_semantics<arbitrary>], iteration_bounds = array<i64: 2, 1, 1>, scalar_prefetch = 0 : i64, scratch_operands = 6 : i64, tpu.core_type = #tpu.core_type<tc>, window_params = [{transform_indices = @transform_0, window_bounds = array<i64: 8, 32>}, {transform_indices = @transform_1, window_bounds = array<i64: 8, 32>}, {transform_indices = @transform_2, window_bounds = array<i64: 8, 32>}, {pipeline_mode = #tpu.pipeline_mode<synchronous>, transform_indices = @transform_3, window_bounds = array<i64: 32, 32>}, {pipeline_mode = #tpu.pipeline_mode<synchronous>, transform_indices = @transform_4, window_bounds = array<i64: 32, 32>}, {pipeline_mode = #tpu.pipeline_mode<synchronous>, transform_indices = @transform_5, window_bounds = array<i64: 32, 32>}, {pipeline_mode = #tpu.pipeline_mode<synchronous>, transform_indices = @transform_6, window_bounds = array<i64: 32, 32>}, {transform_indices = @transform_7, window_bounds = array<i64: 8, 32>}]} {
    %c8_i32 = arith.constant 8 : i32
    %0 = arith.muli %arg2, %c8_i32 : i32
    %1 = tpu.assume_multiple %0, 8 : i32
    %c0_i32 = arith.constant 0 : i32
    %2 = arith.cmpi eq, %arg1, %c0_i32 : i32
    %3 = arith.extui %2 : i1 to i32
    %c0_i32_0 = arith.constant 0 : i32
    %4 = arith.cmpi ne, %3, %c0_i32_0 : i32
    scf.if %4 {
      %c0_65 = arith.constant 0 : index
      %c0_66 = arith.constant 0 : index
      %120 = vector.load %arg4[%c0_65, %c0_66] : memref<8x32xf32, #tpu.memory_space<vmem>>, vector<8x32xf32>
      %c0_67 = arith.constant 0 : index
      %c0_68 = arith.constant 0 : index
      %121 = vector.load %arg7[%c0_67, %c0_68] : memref<32x32xf32, #tpu.memory_space<vmem>>, vector<32x32xf32>
      %cst_69 = arith.constant dense<0.000000e+00> : vector<8x32xf32>
      %122 = tpu.matmul %120, %121, %cst_69 {dimension_numbers = #tpu.dot_dimension_numbers<[1], [0], [0], [1], [0, 0, 1, 1], [], []>} : vector<8x32xf32>, vector<32x32xf32>, vector<8x32xf32> -> vector<8x32xf32>
      %123 = arith.index_cast %1 : i32 to index
      %c0_70 = arith.constant 0 : index
      %124 = vector.load %arg12[%123, %c0_70] : memref<8x32xf32, #tpu.memory_space<vmem>>, vector<8x32xf32>
      tpu.vector_store %arg12[%123, %c0_70], %122 {strides = array<i32>} : memref<8x32xf32, #tpu.memory_space<vmem>>, vector<8x32xf32>,
      %c0_71 = arith.constant 0 : index
      %c0_72 = arith.constant 0 : index
      %125 = vector.load %arg5[%c0_71, %c0_72] : memref<8x32xf32, #tpu.memory_space<vmem>>, vector<8x32xf32>
      %c0_73 = arith.constant 0 : index
      %c0_74 = arith.constant 0 : index
      %126 = vector.load %arg8[%c0_73, %c0_74] : memref<32x32xf32, #tpu.memory_space<vmem>>, vector<32x32xf32>
      %cst_75 = arith.constant dense<0.000000e+00> : vector<8x32xf32>
      %127 = tpu.matmul %125, %126, %cst_75 {dimension_numbers = #tpu.dot_dimension_numbers<[1], [0], [0], [1], [0, 0, 1, 1], [], []>} : vector<8x32xf32>, vector<32x32xf32>, vector<8x32xf32> -> vector<8x32xf32>
      %128 = arith.index_cast %1 : i32 to index
      %c0_76 = arith.constant 0 : index
      %129 = vector.load %arg13[%128, %c0_76] : memref<8x32xf32, #tpu.memory_space<vmem>>, vector<8x32xf32>
      tpu.vector_store %arg13[%128, %c0_76], %127 {strides = array<i32>} : memref<8x32xf32, #tpu.memory_space<vmem>>, vector<8x32xf32>,
    } else {
    }
    %c0_i32_1 = arith.constant 0 : i32
    %5 = arith.cmpi eq, %arg2, %c0_i32_1 : i32
    %6 = arith.extui %5 : i1 to i32
    %c0_i32_2 = arith.constant 0 : i32
    %7 = arith.cmpi ne, %6, %c0_i32_2 : i32
    scf.if %7 {
      %c0_65 = arith.constant 0 : index
      %c0_66 = arith.constant 0 : index
      %120 = vector.load %arg3[%c0_65, %c0_66] : memref<8x32xf32, #tpu.memory_space<vmem>>, vector<8x32xf32>
      %c0_67 = arith.constant 0 : index
      %c0_68 = arith.constant 0 : index
      %121 = vector.load %arg6[%c0_67, %c0_68] : memref<32x32xf32, #tpu.memory_space<vmem>>, vector<32x32xf32>
      %cst_69 = arith.constant dense<0.000000e+00> : vector<8x32xf32>
      %122 = tpu.matmul %120, %121, %cst_69 {dimension_numbers = #tpu.dot_dimension_numbers<[1], [0], [0], [1], [0, 0, 1, 1], [], []>} : vector<8x32xf32>, vector<32x32xf32>, vector<8x32xf32> -> vector<8x32xf32>
      %c0_70 = arith.constant 0 : index
      %c0_71 = arith.constant 0 : index
      %123 = vector.load %arg11[%c0_70, %c0_71] : memref<8x32xf32, #tpu.memory_space<vmem>>, vector<8x32xf32>
      tpu.vector_store %arg11[%c0_70, %c0_71], %122 {strides = array<i32>} : memref<8x32xf32, #tpu.memory_space<vmem>>, vector<8x32xf32>,
      %cst_72 = arith.constant 0.000000e+00 : f32
      %124 = vector.broadcast %cst_72 : f32 to vector<8x32xf32>
      %c0_73 = arith.constant 0 : index
      %c0_74 = arith.constant 0 : index
      %125 = vector.load %arg14[%c0_73, %c0_74] : memref<8x32xf32, #tpu.memory_space<vmem>>, vector<8x32xf32>
      tpu.vector_store %arg14[%c0_73, %c0_74], %124 {strides = array<i32>} : memref<8x32xf32, #tpu.memory_space<vmem>>, vector<8x32xf32>,
      %cst_75 = arith.constant 0xFF800000 : f32
      %126 = vector.broadcast %cst_75 : f32 to vector<8x4xf32>
      %c0_76 = arith.constant 0 : index
      %c0_77 = arith.constant 0 : index
      %127 = vector.load %arg15[%c0_76, %c0_77] : memref<8x4xf32, #tpu.memory_space<vmem>>, vector<8x4xf32>
      tpu.vector_store %arg15[%c0_76, %c0_77], %126 {strides = array<i32>} : memref<8x4xf32, #tpu.memory_space<vmem>>, vector<8x4xf32>,
      %cst_78 = arith.constant 0.000000e+00 : f32
      %128 = vector.broadcast %cst_78 : f32 to vector<8x4xf32>
      %c0_79 = arith.constant 0 : index
      %c0_80 = arith.constant 0 : index
      %129 = vector.load %arg16[%c0_79, %c0_80] : memref<8x4xf32, #tpu.memory_space<vmem>>, vector<8x4xf32>
      tpu.vector_store %arg16[%c0_79, %c0_80], %128 {strides = array<i32>} : memref<8x4xf32, #tpu.memory_space<vmem>>, vector<8x4xf32>,
    } else {
    }
    %c0 = arith.constant 0 : index
    %c0_3 = arith.constant 0 : index
    %8 = vector.load %arg11[%c0, %c0_3] : memref<8x32xf32, #tpu.memory_space<vmem>>, vector<8x32xf32>
    %9 = arith.index_cast %1 : i32 to index
    %c0_4 = arith.constant 0 : index
    %10 = vector.load %arg12[%9, %c0_4] : memref<8x32xf32, #tpu.memory_space<vmem>>, vector<8x32xf32>
    %11 = arith.index_cast %1 : i32 to index
    %c0_5 = arith.constant 0 : index
    %12 = vector.load %arg13[%11, %c0_5] : memref<8x32xf32, #tpu.memory_space<vmem>>, vector<8x32xf32>
    %13 = vector.extract_strided_slice %8 {offsets = [0, 0], sizes = [8, 8], strides = [1, 1]} : vector<8x32xf32> to vector<8x8xf32>
    %14 = vector.extract_strided_slice %10 {offsets = [0, 0], sizes = [8, 8], strides = [1, 1]} : vector<8x32xf32> to vector<8x8xf32>
    %cst = arith.constant dense<0.000000e+00> : vector<8x8xf32>
    %15 = tpu.matmul %13, %14, %cst {dimension_numbers = #tpu.dot_dimension_numbers<[1], [1], [0], [0], [0, 0, 1, 0], [], []>} : vector<8x8xf32>, vector<8x8xf32>, vector<8x8xf32> -> vector<8x8xf32>
    %c0_6 = arith.constant 0 : index
    %c0_7 = arith.constant 0 : index
    %16 = vector.load %arg15[%c0_6, %c0_7] : memref<8x4xf32, #tpu.memory_space<vmem>>, vector<8x1xf32>
    %c0_8 = arith.constant 0 : index
    %c0_9 = arith.constant 0 : index
    %17 = vector.load %arg16[%c0_8, %c0_9] : memref<8x4xf32, #tpu.memory_space<vmem>>, vector<8x1xf32>
    %cst_10 = arith.constant dense<0xFF800000> : vector<8xf32>
    %18 = vector.multi_reduction <maximumf>, %15, %cst_10 [1] : vector<8x8xf32> to vector<8xf32>
    %19 = vector.shape_cast %18 : vector<8xf32> to vector<8x1xf32>
    %20 = arith.maximumf %16, %19 : vector<8x1xf32>
    %21 = arith.subf %16, %20 : vector<8x1xf32>
    %22 = math.exp %21 : vector<8x1xf32>
    %23 = vector.broadcast %20 : vector<8x1xf32> to vector<8x8xf32>
    %24 = arith.subf %15, %23 : vector<8x8xf32>
    %25 = math.exp %24 : vector<8x8xf32>
    %26 = arith.mulf %22, %17 : vector<8x1xf32>
    %cst_11 = arith.constant dense<0.000000e+00> : vector<8xf32>
    %27 = vector.multi_reduction <add>, %25, %cst_11 [1] : vector<8x8xf32> to vector<8xf32>
    %28 = vector.shape_cast %27 : vector<8xf32> to vector<8x1xf32>
    %29 = arith.addf %26, %28 : vector<8x1xf32>
    %c0_12 = arith.constant 0 : index
    %c0_13 = arith.constant 0 : index
    %30 = vector.load %arg16[%c0_12, %c0_13] : memref<8x4xf32, #tpu.memory_space<vmem>>, vector<8x1xf32>
    tpu.vector_store %arg16[%c0_12, %c0_13], %29 {strides = array<i32>} : memref<8x4xf32, #tpu.memory_space<vmem>>, vector<8x1xf32>,
    %c0_14 = arith.constant 0 : index
    %c0_15 = arith.constant 0 : index
    %31 = vector.load %arg14[%c0_14, %c0_15] : memref<8x32xf32, #tpu.memory_space<vmem>>, vector<8x8xf32>
    %32 = vector.broadcast %22 : vector<8x1xf32> to vector<8x8xf32>
    %33 = arith.mulf %32, %31 : vector<8x8xf32>
    %34 = vector.extract_strided_slice %12 {offsets = [0, 0], sizes = [8, 8], strides = [1, 1]} : vector<8x32xf32> to vector<8x8xf32>
    %cst_16 = arith.constant dense<0.000000e+00> : vector<8x8xf32>
    %35 = tpu.matmul %25, %34, %cst_16 {dimension_numbers = #tpu.dot_dimension_numbers<[1], [0], [0], [1], [0, 0, 1, 1], [], []>} : vector<8x8xf32>, vector<8x8xf32>, vector<8x8xf32> -> vector<8x8xf32>
    %36 = arith.addf %33, %35 : vector<8x8xf32>
    %c0_17 = arith.constant 0 : index
    %c0_18 = arith.constant 0 : index
    %37 = vector.load %arg14[%c0_17, %c0_18] : memref<8x32xf32, #tpu.memory_space<vmem>>, vector<8x8xf32>
    tpu.vector_store %arg14[%c0_17, %c0_18], %36 {strides = array<i32>} : memref<8x32xf32, #tpu.memory_space<vmem>>, vector<8x8xf32>,
    %c0_19 = arith.constant 0 : index
    %c0_20 = arith.constant 0 : index
    %38 = vector.load %arg15[%c0_19, %c0_20] : memref<8x4xf32, #tpu.memory_space<vmem>>, vector<8x1xf32>
    tpu.vector_store %arg15[%c0_19, %c0_20], %20 {strides = array<i32>} : memref<8x4xf32, #tpu.memory_space<vmem>>, vector<8x1xf32>,
    %39 = vector.extract_strided_slice %8 {offsets = [0, 8], sizes = [8, 8], strides = [1, 1]} : vector<8x32xf32> to vector<8x8xf32>
    %40 = vector.extract_strided_slice %10 {offsets = [0, 8], sizes = [8, 8], strides = [1, 1]} : vector<8x32xf32> to vector<8x8xf32>
    %cst_21 = arith.constant dense<0.000000e+00> : vector<8x8xf32>
    %41 = tpu.matmul %39, %40, %cst_21 {dimension_numbers = #tpu.dot_dimension_numbers<[1], [1], [0], [0], [0, 0, 1, 0], [], []>} : vector<8x8xf32>, vector<8x8xf32>, vector<8x8xf32> -> vector<8x8xf32>
    %c0_22 = arith.constant 0 : index
    %c1 = arith.constant 1 : index
    %42 = vector.load %arg15[%c0_22, %c1] : memref<8x4xf32, #tpu.memory_space<vmem>>, vector<8x1xf32>
    %c0_23 = arith.constant 0 : index
    %c1_24 = arith.constant 1 : index
    %43 = vector.load %arg16[%c0_23, %c1_24] : memref<8x4xf32, #tpu.memory_space<vmem>>, vector<8x1xf32>
    %cst_25 = arith.constant dense<0xFF800000> : vector<8xf32>
    %44 = vector.multi_reduction <maximumf>, %41, %cst_25 [1] : vector<8x8xf32> to vector<8xf32>
    %45 = vector.shape_cast %44 : vector<8xf32> to vector<8x1xf32>
    %46 = arith.maximumf %42, %45 : vector<8x1xf32>
    %47 = arith.subf %42, %46 : vector<8x1xf32>
    %48 = math.exp %47 : vector<8x1xf32>
    %49 = vector.broadcast %46 : vector<8x1xf32> to vector<8x8xf32>
    %50 = arith.subf %41, %49 : vector<8x8xf32>
    %51 = math.exp %50 : vector<8x8xf32>
    %52 = arith.mulf %48, %43 : vector<8x1xf32>
    %cst_26 = arith.constant dense<0.000000e+00> : vector<8xf32>
    %53 = vector.multi_reduction <add>, %51, %cst_26 [1] : vector<8x8xf32> to vector<8xf32>
    %54 = vector.shape_cast %53 : vector<8xf32> to vector<8x1xf32>
    %55 = arith.addf %52, %54 : vector<8x1xf32>
    %c0_27 = arith.constant 0 : index
    %c1_28 = arith.constant 1 : index
    %56 = vector.load %arg16[%c0_27, %c1_28] : memref<8x4xf32, #tpu.memory_space<vmem>>, vector<8x1xf32>
    tpu.vector_store %arg16[%c0_27, %c1_28], %55 {strides = array<i32>} : memref<8x4xf32, #tpu.memory_space<vmem>>, vector<8x1xf32>,
    %c0_29 = arith.constant 0 : index
    %c8 = arith.constant 8 : index
    %57 = vector.load %arg14[%c0_29, %c8] : memref<8x32xf32, #tpu.memory_space<vmem>>, vector<8x8xf32>
    %58 = vector.broadcast %48 : vector<8x1xf32> to vector<8x8xf32>
    %59 = arith.mulf %58, %57 : vector<8x8xf32>
    %60 = vector.extract_strided_slice %12 {offsets = [0, 8], sizes = [8, 8], strides = [1, 1]} : vector<8x32xf32> to vector<8x8xf32>
    %cst_30 = arith.constant dense<0.000000e+00> : vector<8x8xf32>
    %61 = tpu.matmul %51, %60, %cst_30 {dimension_numbers = #tpu.dot_dimension_numbers<[1], [0], [0], [1], [0, 0, 1, 1], [], []>} : vector<8x8xf32>, vector<8x8xf32>, vector<8x8xf32> -> vector<8x8xf32>
    %62 = arith.addf %59, %61 : vector<8x8xf32>
    %c0_31 = arith.constant 0 : index
    %c8_32 = arith.constant 8 : index
    %63 = vector.load %arg14[%c0_31, %c8_32] : memref<8x32xf32, #tpu.memory_space<vmem>>, vector<8x8xf32>
    tpu.vector_store %arg14[%c0_31, %c8_32], %62 {strides = array<i32>} : memref<8x32xf32, #tpu.memory_space<vmem>>, vector<8x8xf32>,
    %c0_33 = arith.constant 0 : index
    %c1_34 = arith.constant 1 : index
    %64 = vector.load %arg15[%c0_33, %c1_34] : memref<8x4xf32, #tpu.memory_space<vmem>>, vector<8x1xf32>
    tpu.vector_store %arg15[%c0_33, %c1_34], %46 {strides = array<i32>} : memref<8x4xf32, #tpu.memory_space<vmem>>, vector<8x1xf32>,
    %65 = vector.extract_strided_slice %8 {offsets = [0, 16], sizes = [8, 8], strides = [1, 1]} : vector<8x32xf32> to vector<8x8xf32>
    %66 = vector.extract_strided_slice %10 {offsets = [0, 16], sizes = [8, 8], strides = [1, 1]} : vector<8x32xf32> to vector<8x8xf32>
    %cst_35 = arith.constant dense<0.000000e+00> : vector<8x8xf32>
    %67 = tpu.matmul %65, %66, %cst_35 {dimension_numbers = #tpu.dot_dimension_numbers<[1], [1], [0], [0], [0, 0, 1, 0], [], []>} : vector<8x8xf32>, vector<8x8xf32>, vector<8x8xf32> -> vector<8x8xf32>
    %c0_36 = arith.constant 0 : index
    %c2 = arith.constant 2 : index
    %68 = vector.load %arg15[%c0_36, %c2] : memref<8x4xf32, #tpu.memory_space<vmem>>, vector<8x1xf32>
    %c0_37 = arith.constant 0 : index
    %c2_38 = arith.constant 2 : index
    %69 = vector.load %arg16[%c0_37, %c2_38] : memref<8x4xf32, #tpu.memory_space<vmem>>, vector<8x1xf32>
    %cst_39 = arith.constant dense<0xFF800000> : vector<8xf32>
    %70 = vector.multi_reduction <maximumf>, %67, %cst_39 [1] : vector<8x8xf32> to vector<8xf32>
    %71 = vector.shape_cast %70 : vector<8xf32> to vector<8x1xf32>
    %72 = arith.maximumf %68, %71 : vector<8x1xf32>
    %73 = arith.subf %68, %72 : vector<8x1xf32>
    %74 = math.exp %73 : vector<8x1xf32>
    %75 = vector.broadcast %72 : vector<8x1xf32> to vector<8x8xf32>
    %76 = arith.subf %67, %75 : vector<8x8xf32>
    %77 = math.exp %76 : vector<8x8xf32>
    %78 = arith.mulf %74, %69 : vector<8x1xf32>
    %cst_40 = arith.constant dense<0.000000e+00> : vector<8xf32>
    %79 = vector.multi_reduction <add>, %77, %cst_40 [1] : vector<8x8xf32> to vector<8xf32>
    %80 = vector.shape_cast %79 : vector<8xf32> to vector<8x1xf32>
    %81 = arith.addf %78, %80 : vector<8x1xf32>
    %c0_41 = arith.constant 0 : index
    %c2_42 = arith.constant 2 : index
    %82 = vector.load %arg16[%c0_41, %c2_42] : memref<8x4xf32, #tpu.memory_space<vmem>>, vector<8x1xf32>
    tpu.vector_store %arg16[%c0_41, %c2_42], %81 {strides = array<i32>} : memref<8x4xf32, #tpu.memory_space<vmem>>, vector<8x1xf32>,
    %c0_43 = arith.constant 0 : index
    %c16 = arith.constant 16 : index
    %83 = vector.load %arg14[%c0_43, %c16] : memref<8x32xf32, #tpu.memory_space<vmem>>, vector<8x8xf32>
    %84 = vector.broadcast %74 : vector<8x1xf32> to vector<8x8xf32>
    %85 = arith.mulf %84, %83 : vector<8x8xf32>
    %86 = vector.extract_strided_slice %12 {offsets = [0, 16], sizes = [8, 8], strides = [1, 1]} : vector<8x32xf32> to vector<8x8xf32>
    %cst_44 = arith.constant dense<0.000000e+00> : vector<8x8xf32>
    %87 = tpu.matmul %77, %86, %cst_44 {dimension_numbers = #tpu.dot_dimension_numbers<[1], [0], [0], [1], [0, 0, 1, 1], [], []>} : vector<8x8xf32>, vector<8x8xf32>, vector<8x8xf32> -> vector<8x8xf32>
    %88 = arith.addf %85, %87 : vector<8x8xf32>
    %c0_45 = arith.constant 0 : index
    %c16_46 = arith.constant 16 : index
    %89 = vector.load %arg14[%c0_45, %c16_46] : memref<8x32xf32, #tpu.memory_space<vmem>>, vector<8x8xf32>
    tpu.vector_store %arg14[%c0_45, %c16_46], %88 {strides = array<i32>} : memref<8x32xf32, #tpu.memory_space<vmem>>, vector<8x8xf32>,
    %c0_47 = arith.constant 0 : index
    %c2_48 = arith.constant 2 : index
    %90 = vector.load %arg15[%c0_47, %c2_48] : memref<8x4xf32, #tpu.memory_space<vmem>>, vector<8x1xf32>
    tpu.vector_store %arg15[%c0_47, %c2_48], %72 {strides = array<i32>} : memref<8x4xf32, #tpu.memory_space<vmem>>, vector<8x1xf32>,
    %91 = vector.extract_strided_slice %8 {offsets = [0, 24], sizes = [8, 8], strides = [1, 1]} : vector<8x32xf32> to vector<8x8xf32>
    %92 = vector.extract_strided_slice %10 {offsets = [0, 24], sizes = [8, 8], strides = [1, 1]} : vector<8x32xf32> to vector<8x8xf32>
    %cst_49 = arith.constant dense<0.000000e+00> : vector<8x8xf32>
    %93 = tpu.matmul %91, %92, %cst_49 {dimension_numbers = #tpu.dot_dimension_numbers<[1], [1], [0], [0], [0, 0, 1, 0], [], []>} : vector<8x8xf32>, vector<8x8xf32>, vector<8x8xf32> -> vector<8x8xf32>
    %c0_50 = arith.constant 0 : index
    %c3 = arith.constant 3 : index
    %94 = vector.load %arg15[%c0_50, %c3] : memref<8x4xf32, #tpu.memory_space<vmem>>, vector<8x1xf32>
    %c0_51 = arith.constant 0 : index
    %c3_52 = arith.constant 3 : index
    %95 = vector.load %arg16[%c0_51, %c3_52] : memref<8x4xf32, #tpu.memory_space<vmem>>, vector<8x1xf32>
    %cst_53 = arith.constant dense<0xFF800000> : vector<8xf32>
    %96 = vector.multi_reduction <maximumf>, %93, %cst_53 [1] : vector<8x8xf32> to vector<8xf32>
    %97 = vector.shape_cast %96 : vector<8xf32> to vector<8x1xf32>
    %98 = arith.maximumf %94, %97 : vector<8x1xf32>
    %99 = arith.subf %94, %98 : vector<8x1xf32>
    %100 = math.exp %99 : vector<8x1xf32>
    %101 = vector.broadcast %98 : vector<8x1xf32> to vector<8x8xf32>
    %102 = arith.subf %93, %101 : vector<8x8xf32>
    %103 = math.exp %102 : vector<8x8xf32>
    %104 = arith.mulf %100, %95 : vector<8x1xf32>
    %cst_54 = arith.constant dense<0.000000e+00> : vector<8xf32>
    %105 = vector.multi_reduction <add>, %103, %cst_54 [1] : vector<8x8xf32> to vector<8xf32>
    %106 = vector.shape_cast %105 : vector<8xf32> to vector<8x1xf32>
    %107 = arith.addf %104, %106 : vector<8x1xf32>
    %c0_55 = arith.constant 0 : index
    %c3_56 = arith.constant 3 : index
    %108 = vector.load %arg16[%c0_55, %c3_56] : memref<8x4xf32, #tpu.memory_space<vmem>>, vector<8x1xf32>
    tpu.vector_store %arg16[%c0_55, %c3_56], %107 {strides = array<i32>} : memref<8x4xf32, #tpu.memory_space<vmem>>, vector<8x1xf32>,
    %c0_57 = arith.constant 0 : index
    %c24 = arith.constant 24 : index
    %109 = vector.load %arg14[%c0_57, %c24] : memref<8x32xf32, #tpu.memory_space<vmem>>, vector<8x8xf32>
    %110 = vector.broadcast %100 : vector<8x1xf32> to vector<8x8xf32>
    %111 = arith.mulf %110, %109 : vector<8x8xf32>
    %112 = vector.extract_strided_slice %12 {offsets = [0, 24], sizes = [8, 8], strides = [1, 1]} : vector<8x32xf32> to vector<8x8xf32>
    %cst_58 = arith.constant dense<0.000000e+00> : vector<8x8xf32>
    %113 = tpu.matmul %103, %112, %cst_58 {dimension_numbers = #tpu.dot_dimension_numbers<[1], [0], [0], [1], [0, 0, 1, 1], [], []>} : vector<8x8xf32>, vector<8x8xf32>, vector<8x8xf32> -> vector<8x8xf32>
    %114 = arith.addf %111, %113 : vector<8x8xf32>
    %c0_59 = arith.constant 0 : index
    %c24_60 = arith.constant 24 : index
    %115 = vector.load %arg14[%c0_59, %c24_60] : memref<8x32xf32, #tpu.memory_space<vmem>>, vector<8x8xf32>
    tpu.vector_store %arg14[%c0_59, %c24_60], %114 {strides = array<i32>} : memref<8x32xf32, #tpu.memory_space<vmem>>, vector<8x8xf32>,
    %c0_61 = arith.constant 0 : index
    %c3_62 = arith.constant 3 : index
    %116 = vector.load %arg15[%c0_61, %c3_62] : memref<8x4xf32, #tpu.memory_space<vmem>>, vector<8x1xf32>
    tpu.vector_store %arg15[%c0_61, %c3_62], %98 {strides = array<i32>} : memref<8x4xf32, #tpu.memory_space<vmem>>, vector<8x1xf32>,
    %c0_i32_63 = arith.constant 0 : i32
    %117 = arith.cmpi eq, %arg2, %c0_i32_63 : i32
    %118 = arith.extui %117 : i1 to i32
    %c0_i32_64 = arith.constant 0 : i32
    %119 = arith.cmpi ne, %118, %c0_i32_64 : i32
    scf.if %119 {
      %c0_65 = arith.constant 0 : index
      %c0_66 = arith.constant 0 : index
      %120 = vector.load %arg16[%c0_65, %c0_66] : memref<8x4xf32, #tpu.memory_space<vmem>>, vector<8x4xf32>
      %121 = tpu.reciprocal %120 {approx = true} : vector<8x4xf32> -> vector<8x4xf32>
      %122 = arith.mulf %120, %121 : vector<8x4xf32>
      %cst_67 = arith.constant 2.000000e+00 : f32
      %123 = vector.broadcast %cst_67 : f32 to vector<8x4xf32>
      %124 = arith.subf %123, %122 : vector<8x4xf32>
      %125 = arith.mulf %121, %124 : vector<8x4xf32>
      %c0_68 = arith.constant 0 : index
      %c0_69 = arith.constant 0 : index
      %126 = vector.load %arg14[%c0_68, %c0_69] : memref<8x32xf32, #tpu.memory_space<vmem>>, vector<8x8xf32>
      %127 = vector.extract_strided_slice %125 {offsets = [0, 0], sizes = [8, 1], strides = [1, 1]} : vector<8x4xf32> to vector<8x1xf32>
      %128 = vector.broadcast %127 : vector<8x1xf32> to vector<8x8xf32>
      %129 = arith.mulf %126, %128 : vector<8x8xf32>
      %c0_70 = arith.constant 0 : index
      %c0_71 = arith.constant 0 : index
      %130 = vector.load %arg14[%c0_70, %c0_71] : memref<8x32xf32, #tpu.memory_space<vmem>>, vector<8x8xf32>
      tpu.vector_store %arg14[%c0_70, %c0_71], %129 {strides = array<i32>} : memref<8x32xf32, #tpu.memory_space<vmem>>, vector<8x8xf32>,
      %c0_72 = arith.constant 0 : index
      %c8_73 = arith.constant 8 : index
      %131 = vector.load %arg14[%c0_72, %c8_73] : memref<8x32xf32, #tpu.memory_space<vmem>>, vector<8x8xf32>
      %132 = vector.extract_strided_slice %125 {offsets = [0, 1], sizes = [8, 1], strides = [1, 1]} : vector<8x4xf32> to vector<8x1xf32>
      %133 = vector.broadcast %132 : vector<8x1xf32> to vector<8x8xf32>
      %134 = arith.mulf %131, %133 : vector<8x8xf32>
      %c0_74 = arith.constant 0 : index
      %c8_75 = arith.constant 8 : index
      %135 = vector.load %arg14[%c0_74, %c8_75] : memref<8x32xf32, #tpu.memory_space<vmem>>, vector<8x8xf32>
      tpu.vector_store %arg14[%c0_74, %c8_75], %134 {strides = array<i32>} : memref<8x32xf32, #tpu.memory_space<vmem>>, vector<8x8xf32>,
      %c0_76 = arith.constant 0 : index
      %c16_77 = arith.constant 16 : index
      %136 = vector.load %arg14[%c0_76, %c16_77] : memref<8x32xf32, #tpu.memory_space<vmem>>, vector<8x8xf32>
      %137 = vector.extract_strided_slice %125 {offsets = [0, 2], sizes = [8, 1], strides = [1, 1]} : vector<8x4xf32> to vector<8x1xf32>
      %138 = vector.broadcast %137 : vector<8x1xf32> to vector<8x8xf32>
      %139 = arith.mulf %136, %138 : vector<8x8xf32>
      %c0_78 = arith.constant 0 : index
      %c16_79 = arith.constant 16 : index
      %140 = vector.load %arg14[%c0_78, %c16_79] : memref<8x32xf32, #tpu.memory_space<vmem>>, vector<8x8xf32>
      tpu.vector_store %arg14[%c0_78, %c16_79], %139 {strides = array<i32>} : memref<8x32xf32, #tpu.memory_space<vmem>>, vector<8x8xf32>,
      %c0_80 = arith.constant 0 : index
      %c24_81 = arith.constant 24 : index
      %141 = vector.load %arg14[%c0_80, %c24_81] : memref<8x32xf32, #tpu.memory_space<vmem>>, vector<8x8xf32>
      %142 = vector.extract_strided_slice %125 {offsets = [0, 3], sizes = [8, 1], strides = [1, 1]} : vector<8x4xf32> to vector<8x1xf32>
      %143 = vector.broadcast %142 : vector<8x1xf32> to vector<8x8xf32>
      %144 = arith.mulf %141, %143 : vector<8x8xf32>
      %c0_82 = arith.constant 0 : index
      %c24_83 = arith.constant 24 : index
      %145 = vector.load %arg14[%c0_82, %c24_83] : memref<8x32xf32, #tpu.memory_space<vmem>>, vector<8x8xf32>
      tpu.vector_store %arg14[%c0_82, %c24_83], %144 {strides = array<i32>} : memref<8x32xf32, #tpu.memory_space<vmem>>, vector<8x8xf32>,
      %c0_84 = arith.constant 0 : index
      %c0_85 = arith.constant 0 : index
      %146 = vector.load %arg14[%c0_84, %c0_85] : memref<8x32xf32, #tpu.memory_space<vmem>>, vector<8x32xf32>
      %c0_86 = arith.constant 0 : index
      %c0_87 = arith.constant 0 : index
      %147 = vector.load %arg9[%c0_86, %c0_87] : memref<32x32xf32, #tpu.memory_space<vmem>>, vector<32x32xf32>
      %cst_88 = arith.constant dense<0.000000e+00> : vector<8x32xf32>
      %148 = tpu.matmul %146, %147, %cst_88 {dimension_numbers = #tpu.dot_dimension_numbers<[1], [0], [0], [1], [0, 0, 1, 1], [], []>} : vector<8x32xf32>, vector<32x32xf32>, vector<8x32xf32> -> vector<8x32xf32>
      %c0_89 = arith.constant 0 : index
      %c0_90 = arith.constant 0 : index
      %149 = vector.load %arg3[%c0_89, %c0_90] : memref<8x32xf32, #tpu.memory_space<vmem>>, vector<8x32xf32>
      %150 = arith.addf %148, %149 : vector<8x32xf32>
      %c0_91 = arith.constant 0 : index
      %c0_92 = arith.constant 0 : index
      %151 = vector.load %arg10[%c0_91, %c0_92] : memref<8x32xf32, #tpu.memory_space<vmem>>, vector<8x32xf32>
      tpu.vector_store %arg10[%c0_91, %c0_92], %150 {strides = array<i32>} : memref<8x32xf32, #tpu.memory_space<vmem>>, vector<8x32xf32>,
    } else {
    }
    return
  }
  func.func @transform_0(%arg0: i32, %arg1: i32, %arg2: i32) -> (i32, i32) {
    %c1_i32 = arith.constant 1 : i32
    %0 = arith.muli %arg0, %c1_i32 : i32
    %1 = arith.addi %0, %arg1 : i32
    %c0_i32 = arith.constant 0 : i32
    %c0_i32_0 = arith.constant 0 : i32
    return %1, %c0_i32 : i32, i32
  }
  func.func @transform_1(%arg0: i32, %arg1: i32, %arg2: i32) -> (i32, i32) {
    %c1_i32 = arith.constant 1 : i32
    %0 = arith.muli %arg0, %c1_i32 : i32
    %c0_i32 = arith.constant 0 : i32
    %1 = arith.cmpi eq, %arg1, %c0_i32 : i32
    %c0_i32_0 = arith.constant 0 : i32
    %2 = arith.select %1, %arg2, %c0_i32_0 : i32
    %3 = arith.addi %0, %2 : i32
    %c0_i32_1 = arith.constant 0 : i32
    %c0_i32_2 = arith.constant 0 : i32
    return %3, %c0_i32_1 : i32, i32
  }
  func.func @transform_2(%arg0: i32, %arg1: i32, %arg2: i32) -> (i32, i32) {
    %c1_i32 = arith.constant 1 : i32
    %0 = arith.muli %arg0, %c1_i32 : i32
    %c0_i32 = arith.constant 0 : i32
    %1 = arith.cmpi eq, %arg1, %c0_i32 : i32
    %c0_i32_0 = arith.constant 0 : i32
    %2 = arith.select %1, %arg2, %c0_i32_0 : i32
    %3 = arith.addi %0, %2 : i32
    %c0_i32_1 = arith.constant 0 : i32
    %c0_i32_2 = arith.constant 0 : i32
    return %3, %c0_i32_1 : i32, i32
  }
  func.func @transform_3(%arg0: i32, %arg1: i32, %arg2: i32) -> (i32, i32) {
    %c0_i32 = arith.constant 0 : i32
    %c0_i32_0 = arith.constant 0 : i32
    %c0_i32_1 = arith.constant 0 : i32
    return %c0_i32, %c0_i32_0 : i32, i32
  }
  func.func @transform_4(%arg0: i32, %arg1: i32, %arg2: i32) -> (i32, i32) {
    %c0_i32 = arith.constant 0 : i32
    %c0_i32_0 = arith.constant 0 : i32
    %c0_i32_1 = arith.constant 0 : i32
    return %c0_i32, %c0_i32_0 : i32, i32
  }
  func.func @transform_5(%arg0: i32, %arg1: i32, %arg2: i32) -> (i32, i32) {
    %c0_i32 = arith.constant 0 : i32
    %c0_i32_0 = arith.constant 0 : i32
    %c0_i32_1 = arith.constant 0 : i32
    return %c0_i32, %c0_i32_0 : i32, i32
  }
  func.func @transform_6(%arg0: i32, %arg1: i32, %arg2: i32) -> (i32, i32) {
    %c0_i32 = arith.constant 0 : i32
    %c0_i32_0 = arith.constant 0 : i32
    %c0_i32_1 = arith.constant 0 : i32
    return %c0_i32, %c0_i32_0 : i32, i32
  }
  func.func @transform_7(%arg0: i32, %arg1: i32, %arg2: i32) -> (i32, i32) {
    %c1_i32 = arith.constant 1 : i32
    %0 = arith.muli %arg0, %c1_i32 : i32
    %1 = arith.addi %0, %arg1 : i32
    %c0_i32 = arith.constant 0 : i32
    %c0_i32_0 = arith.constant 0 : i32
    return %1, %c0_i32 : i32, i32
  }
}

</mosaic_0001>

<llo_original>
// kernel: tpu_custom_call.1
$region0: #{tpu_custom_call.1}
  #allocation0 [shape = 'u32[]', space=smem, size = 0x4, offset = 0x4, fixed_abs, tag = 'smem constant byte address 0x4 - core index']
  #allocation1 [shape = 'u32[144,128]{1,0:T(1,128)}', space=vmem, size = 0x12000, scoped, tag = 'internal scratch']
  #allocation2 [shape = 'f32[8,32]{1,0:T(8,128)}', space=vmem, size = 0x1000, scoped, tag = 'scratch operand']
  #allocation3 [shape = 'f32[8,32]{1,0:T(8,128)}', space=vmem, size = 0x1000, scoped, tag = 'scratch operand']
  #allocation4 [shape = 'f32[8,32]{1,0:T(8,128)}', space=vmem, size = 0x1000, scoped, tag = 'scratch operand']
  #allocation5 [shape = 'f32[8,32]{1,0:T(8,128)}', space=vmem, size = 0x1000, scoped, tag = 'scratch operand']
  #allocation6 [shape = 'f32[8,4]{1,0:T(8,128)}', space=vmem, size = 0x1000, scoped, tag = 'scratch operand']
  #allocation7 [shape = 'f32[8,4]{1,0:T(8,128)}', space=vmem, size = 0x1000, scoped, tag = 'scratch operand']
  %s0 = inlined_call_operand.hbm [shape: f32[16,32], index: 0, kind: input, shape index: {}]
  %s1 = inlined_call_operand.hbm [shape: f32[16,32], index: 1, kind: input, shape index: {}]
  %s2 = inlined_call_operand.hbm [shape: f32[16,32], index: 2, kind: input, shape index: {}]
  %s3 = inlined_call_operand.hbm [shape: f32[32,32], index: 3, kind: input, shape index: {}]
  %s4 = inlined_call_operand.hbm [shape: f32[32,32], index: 4, kind: input, shape index: {}]
  %s5 = inlined_call_operand.hbm [shape: f32[32,32], index: 5, kind: input, shape index: {}]
  %s6 = inlined_call_operand.hbm [shape: f32[32,32], index: 6, kind: input, shape index: {}]
  %s7 = inlined_call_operand.hbm [shape: f32[16,32], index: 7, kind: output, shape index: {}]
  %s8 = sld [smem:[#allocation0]]
  $region101: #{tpu_custom_call.1} parent=0
    _
  %s10 = ssub.s32 1, %s8
  %s11 = scalar_select 0, %s10, %s8
  $region1: #{tpu_custom_call.1} parent=0
    #allocation8 [shape = 'u8[8192]{0}', space=vmem, size = 0x2000, scoped, tag = 'input window, operand 0']
    #allocation9 [shape = 's32[2]{0}', space=sflag, size = 0x8, scoped, tag = 'scoped memory for tpu_custom_call.1']
    #allocation10 [shape = 's32[2]{0}', space=sflag, size = 0x8, scoped, tag = 'scoped memory for tpu_custom_call.1']
    #allocation11 [shape = 'u8[8192]{0}', space=vmem, size = 0x2000, scoped, tag = 'input window, operand 1']
    #allocation12 [shape = 's32[2]{0}', space=sflag, size = 0x8, scoped, tag = 'scoped memory for tpu_custom_call.1']
    #allocation13 [shape = 'u8[8192]{0}', space=vmem, size = 0x2000, scoped, tag = 'input window, operand 2']
    #allocation14 [shape = 'u8[16384]{0}', space=vmem, size = 0x4000, scoped, tag = 'input window, operand 3, single buffered']
    #allocation15 [shape = 's32[1]{0}', space=sflag, size = 0x4, scoped, tag = 'scoped memory for tpu_custom_call.1']
    #allocation16 [shape = 'u8[16384]{0}', space=vmem, size = 0x4000, scoped, tag = 'input window, operand 4, single buffered']
    #allocation17 [shape = 'u8[16384]{0}', space=vmem, size = 0x4000, scoped, tag = 'input window, operand 5, single buffered']
    #allocation18 [shape = 's32[1]{0}', space=sflag, size = 0x4, scoped, tag = 'scoped memory for tpu_custom_call.1']
    #allocation19 [shape = 'u8[16384]{0}', space=vmem, size = 0x4000, scoped, tag = 'input window, operand 6, single buffered']
    #allocation20 [shape = 'u8[8192]{0}', space=vmem, size = 0x2000, scoped, tag = 'output window, operand 0']
    %12 = vsyncpa [#allocation9], 0
    %s13 = scalar_lea.sflag [#allocation9], 1
    %14 = vsyncpa %s13, 0
    %15 = vsyncpa [#allocation12], 0
    %s16 = scalar_lea.sflag [#allocation12], 1
    %17 = vsyncpa %s16, 0
    %18 = vsyncpa [#allocation15], 0
    %19 = vsyncpa [#allocation18], 0
    %20 = vsyncpa [#allocation10], 0
    %s21 = scalar_lea.sflag [#allocation10], 1
    %22 = vsyncpa %s21, 0
    loop: start=0, step=1, limit=4
    $region2: #{tpu_custom_call.1} parent=1 // loop_pre_header
      _
    $region3: #{tpu_custom_call.1} parent=1 // loop_header
      %s24 = sphi 0, %s28
      %p25 = scmp.ge.s32.totalorder %s24, 4
      %s31 = sphi 0, %s50
      %s32 = sphi 0, %s46
      %s33 = sphi 0, %s42
      %s34 = sphi 0, %s31
      %s35 = sphi 0, %s32
      %s36 = sphi 0, %s33
      %s37 = sphi 0, %s34
      %s38 = sphi 0, %s35
      %s39 = sphi 0, %s36
      %s55 = sphi 0, %s57
      %s58 = sphi 0, %s55
      %s59 = sphi 0, %s58
      %s75 = sphi 0, %s59
      %s87 = sphi 0, %s89
      %s90 = sphi 0, %s87
      %s91 = sphi 0, %s90
      %s107 = sphi 0, %s91
      %s119 = sphi 0, %s121
      %s122 = sphi 0, %s119
      %s123 = sphi 0, %s122
      %s139 = sphi 0, %s123
      %s143 = sphi 0, %s143
      %s145 = sphi 0, %s143
      %s146 = sphi 0, %s145
      %s160 = sphi 0, %s146
      %s164 = sphi 0, %s164
      %s166 = sphi 0, %s164
      %s167 = sphi 0, %s166
      %s181 = sphi 0, %s167
      %s185 = sphi 0, %s185
      %s187 = sphi 0, %s185
      %s188 = sphi 0, %s187
      %s202 = sphi 0, %s188
      %s206 = sphi 0, %s206
      %s208 = sphi 0, %s206
      %s209 = sphi 0, %s208
      %s223 = sphi 0, %s209
      %s231 = sphi 0, %s233
      %s234 = sphi 0, %s231
      %s235 = sphi 0, %s234
      %s251 = sphi 0, %s235
    $region4: #{tpu_custom_call.1} parent=1 // loop_header_branch
      %27 = sbr.rel (%p25) target = $region8
    $region5: #{tpu_custom_call.1} parent=1 // loop_body
      %s29 = ssub.s32 %s24, 1
      %s30 = ssub.s32 %s24, 2
      %s40 = sadd.s32 1, %s33
      %p41 = scmp.ge.s32.totalorder %s40, 1
      %s42 = scalar_select %p41, 0, %s40
      %s43 = sadd.s32 1, %s32
      %s44 = scalar_select %p41, %s43, %s32
      %p45 = scmp.ge.s32.totalorder %s44, 1
      %s46 = scalar_select %p45, 0, %s44
      %s47 = sadd.s32 1, %s31
      %s48 = scalar_select %p45, %s47, %s31
      %p49 = scmp.ge.s32.totalorder %s48, 2
      %s50 = scalar_select %p49, 0, %s48
      %s51 = sadd.s32 %s31, %s32
      %s52 = sadd.s32 %s50, %s46
      %s53 = ssub.s32 %s51, %s52
      %p54 = scmp.eq.s32.totalorder %s53, 0
      %s56 = sadd.s32 %s55, 1
      %s57 = scalar_select %p54, %s55, %s56
      %p60 = pneg %p54
      %p61 = scmp.eq.s32.totalorder %s24, 1
      %p62 = por %p60, %p61
      %p63 = scmp.ne.s32.totalorder %s55, %s58
      %p64 = scmp.eq.s32.totalorder %s24, 0
      %p65 = por %p63, %p64
      %p66 = scmp.ne.s32.totalorder %s55, %s58
      %p67 = scmp.eq.s32.totalorder %s29, 1
      %p68 = por %p66, %p67
      %p69 = scmp.ne.s32.totalorder %s58, %s59
      %p70 = scmp.eq.s32.totalorder %s29, 0
      %p71 = por %p69, %p70
      %p72 = scmp.ne.s32.totalorder %s58, %s59
      %p73 = scmp.eq.s32.totalorder %s30, 1
      %p74 = por %p72, %p73
      %p76 = scmp.ne.s32.totalorder %s59, %s75
      %p77 = scmp.eq.s32.totalorder %s30, 0
      %p78 = por %p76, %p77
      %p79 = scmp.eq.s32.totalorder %s32, 0
      %s80 = scalar_select %p79, %s33, 0
      %s81 = sadd.s32 %s31, %s80
      %p82 = scmp.eq.s32.totalorder %s46, 0
      %s83 = scalar_select %p82, %s42, 0
      %s84 = sadd.s32 %s50, %s83
      %s85 = ssub.s32 %s81, %s84
      %p86 = scmp.eq.s32.totalorder %s85, 0
      %s88 = sadd.s32 %s87, 1
      %s89 = scalar_select %p86, %s87, %s88
      %p92 = pneg %p86
      %p93 = scmp.eq.s32.totalorder %s24, 1
      %p94 = por %p92, %p93
      %p95 = scmp.ne.s32.totalorder %s87, %s90
      %p96 = scmp.eq.s32.totalorder %s24, 0
      %p97 = por %p95, %p96
      %p98 = scmp.ne.s32.totalorder %s87, %s90
      %p99 = scmp.eq.s32.totalorder %s29, 1
      %p100 = por %p98, %p99
      %p101 = scmp.ne.s32.totalorder %s90, %s91
      %p102 = scmp.eq.s32.totalorder %s29, 0
      %p103 = por %p101, %p102
      %p104 = scmp.ne.s32.totalorder %s90, %s91
      %p105 = scmp.eq.s32.totalorder %s30, 1
      %p106 = por %p104, %p105
      %p108 = scmp.ne.s32.totalorder %s91, %s107
      %p109 = scmp.eq.s32.totalorder %s30, 0
      %p110 = por %p108, %p109
      %p111 = scmp.eq.s32.totalorder %s32, 0
      %s112 = scalar_select %p111, %s33, 0
      %s113 = sadd.s32 %s31, %s112
      %p114 = scmp.eq.s32.totalorder %s46, 0
      %s115 = scalar_select %p114, %s42, 0
      %s116 = sadd.s32 %s50, %s115
      %s117 = ssub.s32 %s113, %s116
      %p118 = scmp.eq.s32.totalorder %s117, 0
      %s120 = sadd.s32 %s119, 1
      %s121 = scalar_select %p118, %s119, %s120
      %p124 = pneg %p118
      %p125 = scmp.eq.s32.totalorder %s24, 1
      %p126 = por %p124, %p125
      %p127 = scmp.ne.s32.totalorder %s119, %s122
      %p128 = scmp.eq.s32.totalorder %s24, 0
      %p129 = por %p127, %p128
      %p130 = scmp.ne.s32.totalorder %s119, %s122
      %p131 = scmp.eq.s32.totalorder %s29, 1
      %p132 = por %p130, %p131
      %p133 = scmp.ne.s32.totalorder %s122, %s123
      %p134 = scmp.eq.s32.totalorder %s29, 0
      %p135 = por %p133, %p134
      %p136 = scmp.ne.s32.totalorder %s122, %s123
      %p137 = scmp.eq.s32.totalorder %s30, 1
      %p138 = por %p136, %p137
      %p140 = scmp.ne.s32.totalorder %s123, %s139
      %p141 = scmp.eq.s32.totalorder %s30, 0
      %p142 = por %p140, %p141
      %s144 = sadd.s32 %s143, 1
      %p147 = scmp.eq.s32.totalorder %s24, 1
      %p148 = scmp.ne.s32.totalorder %s143, %s145
      %p149 = scmp.eq.s32.totalorder %s24, 0
      %p150 = por %p148, %p149
      %p151 = scmp.ne.s32.totalorder %s143, %s145
      %p152 = scmp.eq.s32.totalorder %s29, 1
      %p153 = por %p151, %p152
      %p154 = scmp.ne.s32.totalorder %s145, %s146
      %p155 = scmp.eq.s32.totalorder %s29, 0
      %p156 = por %p154, %p155
      %p157 = scmp.ne.s32.totalorder %s145, %s146
      %p158 = scmp.eq.s32.totalorder %s30, 1
      %p159 = por %p157, %p158
      %p161 = scmp.ne.s32.totalorder %s146, %s160
      %p162 = scmp.eq.s32.totalorder %s30, 0
      %p163 = por %p161, %p162
      %s165 = sadd.s32 %s164, 1
      %p168 = scmp.eq.s32.totalorder %s24, 1
      %p169 = scmp.ne.s32.totalorder %s164, %s166
      %p170 = scmp.eq.s32.totalorder %s24, 0
      %p171 = por %p169, %p170
      %p172 = scmp.ne.s32.totalorder %s164, %s166
      %p173 = scmp.eq.s32.totalorder %s29, 1
      %p174 = por %p172, %p173
      %p175 = scmp.ne.s32.totalorder %s166, %s167
      %p176 = scmp.eq.s32.totalorder %s29, 0
      %p177 = por %p175, %p176
      %p178 = scmp.ne.s32.totalorder %s166, %s167
      %p179 = scmp.eq.s32.totalorder %s30, 1
      %p180 = por %p178, %p179
      %p182 = scmp.ne.s32.totalorder %s167, %s181
      %p183 = scmp.eq.s32.totalorder %s30, 0
      %p184 = por %p182, %p183
      %s186 = sadd.s32 %s185, 1
      %p189 = scmp.eq.s32.totalorder %s24, 1
      %p190 = scmp.ne.s32.totalorder %s185, %s187
      %p191 = scmp.eq.s32.totalorder %s24, 0
      %p192 = por %p190, %p191
      %p193 = scmp.ne.s32.totalorder %s185, %s187
      %p194 = scmp.eq.s32.totalorder %s29, 1
      %p195 = por %p193, %p194
      %p196 = scmp.ne.s32.totalorder %s187, %s188
      %p197 = scmp.eq.s32.totalorder %s29, 0
      %p198 = por %p196, %p197
      %p199 = scmp.ne.s32.totalorder %s187, %s188
      %p200 = scmp.eq.s32.totalorder %s30, 1
      %p201 = por %p199, %p200
      %p203 = scmp.ne.s32.totalorder %s188, %s202
      %p204 = scmp.eq.s32.totalorder %s30, 0
      %p205 = por %p203, %p204
      %s207 = sadd.s32 %s206, 1
      %p210 = scmp.eq.s32.totalorder %s24, 1
      %p211 = scmp.ne.s32.totalorder %s206, %s208
      %p212 = scmp.eq.s32.totalorder %s24, 0
      %p213 = por %p211, %p212
      %p214 = scmp.ne.s32.totalorder %s206, %s208
      %p215 = scmp.eq.s32.totalorder %s29, 1
      %p216 = por %p214, %p215
      %p217 = scmp.ne.s32.totalorder %s208, %s209
      %p218 = scmp.eq.s32.totalorder %s29, 0
      %p219 = por %p217, %p218
      %p220 = scmp.ne.s32.totalorder %s208, %s209
      %p221 = scmp.eq.s32.totalorder %s30, 1
      %p222 = por %p220, %p221
      %p224 = scmp.ne.s32.totalorder %s209, %s223
      %p225 = scmp.eq.s32.totalorder %s30, 0
      %p226 = por %p224, %p225
      %s227 = sadd.s32 %s31, %s32
      %s228 = sadd.s32 %s50, %s46
      %s229 = ssub.s32 %s227, %s228
      %p230 = scmp.eq.s32.totalorder %s229, 0
      %s232 = sadd.s32 %s231, 1
      %s233 = scalar_select %p230, %s231, %s232
      %p236 = pneg %p230
      %p237 = scmp.eq.s32.totalorder %s24, 1
      %p238 = por %p236, %p237
      %p239 = scmp.ne.s32.totalorder %s231, %s234
      %p240 = scmp.eq.s32.totalorder %s24, 0
      %p241 = por %p239, %p240
      %p242 = scmp.ne.s32.totalorder %s231, %s234
      %p243 = scmp.eq.s32.totalorder %s29, 1
      %p244 = por %p242, %p243
      %p245 = scmp.ne.s32.totalorder %s234, %s235
      %p246 = scmp.eq.s32.totalorder %s29, 0
      %p247 = por %p245, %p246
      %p248 = scmp.ne.s32.totalorder %s234, %s235
      %p249 = scmp.eq.s32.totalorder %s30, 1
      %p250 = por %p248, %p249
      %p252 = scmp.ne.s32.totalorder %s235, %s251
      %p253 = scmp.eq.s32.totalorder %s30, 0
      %p254 = por %p252, %p253
      %p255 = scmp.le.s32.totalorder 1, %s24
      %p256 = scmp.lt.s32.totalorder %s24, 3
      %p257 = pnand %p255, %p256
      %p258 = pneg %p257
      // Predicated region
      $region9: #{tpu_custom_call.1} parent=5 // pred_check
        _
      $region10: #{tpu_custom_call.1} parent=5 // pred_check_branch
        %260 = sbr.rel (%p257) target = $region12
      $region11: #{tpu_custom_call.1} parent=5 // pred_region
        %s261 = ssub.s32 %s24, 1
        // Predicated region
        $region13: #{tpu_custom_call.1} parent=11 // pred_check
          %p262 = pneg %p156
        $region14: #{tpu_custom_call.1} parent=11 // pred_check_branch
          %264 = sbr.rel (%p262) target = $region16
        $region15: #{tpu_custom_call.1} parent=11 // pred_region
          %s266 = ssub.s32 512, 512
          %267 = vsyncadd [#allocation15], %s266
          %s268 = sshll.u32 [#allocation14], 4
          %s269 = int_to_ptr.vmem [resolvable:$true] %s268
          %274 = dma.hbm_to_vmem [thread:$0]  %s3, 512, %s269, [#allocation15], 128, 128, 8
        $region16: #{tpu_custom_call.1} parent=11 // pred_fallthru
          _
        // Predicated region
        $region17: #{tpu_custom_call.1} parent=11 // pred_check
          %p275 = pneg %p177
        $region18: #{tpu_custom_call.1} parent=11 // pred_check_branch
          %277 = sbr.rel (%p275) target = $region20
        $region19: #{tpu_custom_call.1} parent=11 // pred_region
          %s279 = ssub.s32 512, 512
          %280 = vsyncadd [#allocation15], %s279
          %s281 = sshll.u32 [#allocation16], 4
          %s282 = int_to_ptr.vmem [resolvable:$true] %s281
          %287 = dma.hbm_to_vmem [thread:$0]  %s4, 512, %s282, [#allocation15], 128, 128, 8
        $region20: #{tpu_custom_call.1} parent=11 // pred_fallthru
          _
        // Predicated region
        $region21: #{tpu_custom_call.1} parent=11 // pred_check
          %p288 = pneg %p198
        $region22: #{tpu_custom_call.1} parent=11 // pred_check_branch
          %290 = sbr.rel (%p288) target = $region24
        $region23: #{tpu_custom_call.1} parent=11 // pred_region
          %s292 = ssub.s32 512, 512
          %293 = vsyncadd [#allocation18], %s292
          %s294 = sshll.u32 [#allocation17], 4
          %s295 = int_to_ptr.vmem [resolvable:$true] %s294
          %300 = dma.hbm_to_vmem [thread:$0]  %s5, 512, %s295, [#allocation18], 128, 128, 8
        $region24: #{tpu_custom_call.1} parent=11 // pred_fallthru
          _
        // Predicated region
        $region25: #{tpu_custom_call.1} parent=11 // pred_check
          %p301 = pneg %p219
        $region26: #{tpu_custom_call.1} parent=11 // pred_check_branch
          %303 = sbr.rel (%p301) target = $region28
        $region27: #{tpu_custom_call.1} parent=11 // pred_region
          %s305 = ssub.s32 512, 512
          %306 = vsyncadd [#allocation18], %s305
          %s307 = sshll.u32 [#allocation19], 4
          %s308 = int_to_ptr.vmem [resolvable:$true] %s307
          %313 = dma.hbm_to_vmem [thread:$0]  %s6, 512, %s308, [#allocation18], 128, 128, 8
        $region28: #{tpu_custom_call.1} parent=11 // pred_fallthru
          _
      $region12: #{tpu_custom_call.1} parent=5 // pred_fallthru
        _
      %p314 = scmp.lt.s32.totalorder %s24, 2
      // Predicated region
      $region29: #{tpu_custom_call.1} parent=5 // pred_check
        %p315 = pneg %p314
      $region30: #{tpu_custom_call.1} parent=5 // pred_check_branch
        %317 = sbr.rel (%p315) target = $region32
      $region31: #{tpu_custom_call.1} parent=5 // pred_region
        // Predicated region
        $region33: #{tpu_custom_call.1} parent=31 // pred_check
          %p318 = pneg %p65
        $region34: #{tpu_custom_call.1} parent=31 // pred_check_branch
          %320 = sbr.rel (%p318) target = $region36
        $region35: #{tpu_custom_call.1} parent=31 // pred_region
          %s321 = sand.u32 %s55, 1
          %s322 = scalar_lea.sflag [#allocation9], %s321
          %s323 = sand.u32 %s55, 1
          %s324 = smul.addr %s323, 8
          %s325 = scalar_lea.vmem [#allocation8], %s324
          %s326 = sadd.s32 %s31, %s32
          %s328 = ssub.s32 128, 128
          %329 = vsyncadd %s322, %s328
          %s330 = smul.addr %s326, 128
          %s331 = scalar_lea.hbm %s0, %s330
          %s333 = sshll.u32 %s325, 4
          %s334 = int_to_ptr.vmem [resolvable:$true] %s333
          %336 = dma.hbm_to_vmem [thread:$0]  %s331, 128, %s334, %s322
        $region36: #{tpu_custom_call.1} parent=31 // pred_fallthru
          _
        // Predicated region
        $region37: #{tpu_custom_call.1} parent=31 // pred_check
          %p337 = pneg %p97
        $region38: #{tpu_custom_call.1} parent=31 // pred_check_branch
          %339 = sbr.rel (%p337) target = $region40
        $region39: #{tpu_custom_call.1} parent=31 // pred_region
          %s340 = sand.u32 %s24, 1
          %s341 = scalar_lea.sflag [#allocation12], %s340
          %s342 = sand.u32 %s87, 1
          %s343 = smul.addr %s342, 8
          %s344 = scalar_lea.vmem [#allocation11], %s343
          %p345 = scmp.eq.s32.totalorder %s32, 0
          %s346 = scalar_select %p345, %s33, 0
          %s347 = sadd.s32 %s31, %s346
          %s349 = ssub.s32 128, 128
          %350 = vsyncadd %s341, %s349
          %s351 = smul.addr %s347, 128
          %s352 = scalar_lea.hbm %s1, %s351
          %s354 = sshll.u32 %s344, 4
          %s355 = int_to_ptr.vmem [resolvable:$true] %s354
          %357 = dma.hbm_to_vmem [thread:$0]  %s352, 128, %s355, %s341
        $region40: #{tpu_custom_call.1} parent=31 // pred_fallthru
          _
        // Predicated region
        $region41: #{tpu_custom_call.1} parent=31 // pred_check
          %p358 = pneg %p129
        $region42: #{tpu_custom_call.1} parent=31 // pred_check_branch
          %360 = sbr.rel (%p358) target = $region44
        $region43: #{tpu_custom_call.1} parent=31 // pred_region
          %s361 = sand.u32 %s24, 1
          %s362 = scalar_lea.sflag [#allocation12], %s361
          %s363 = sand.u32 %s119, 1
          %s364 = smul.addr %s363, 8
          %s365 = scalar_lea.vmem [#allocation13], %s364
          %p366 = scmp.eq.s32.totalorder %s32, 0
          %s367 = scalar_select %p366, %s33, 0
          %s368 = sadd.s32 %s31, %s367
          %s370 = ssub.s32 128, 128
          %371 = vsyncadd %s362, %s370
          %s372 = smul.addr %s368, 128
          %s373 = scalar_lea.hbm %s2, %s372
          %s375 = sshll.u32 %s365, 4
          %s376 = int_to_ptr.vmem [resolvable:$true] %s375
          %378 = dma.hbm_to_vmem [thread:$0]  %s373, 128, %s376, %s362
        $region44: #{tpu_custom_call.1} parent=31 // pred_fallthru
          _
      $region32: #{tpu_custom_call.1} parent=5 // pred_fallthru
        _
      %p379 = scmp.le.s32.totalorder 1, %s24
      %p380 = scmp.lt.s32.totalorder %s24, 3
      %p381 = pnand %p379, %p380
      %p382 = pneg %p381
      // Predicated region
      $region45: #{tpu_custom_call.1} parent=5 // pred_check
        _
      $region46: #{tpu_custom_call.1} parent=5 // pred_check_branch
        %384 = sbr.rel (%p381) target = $region48
      $region47: #{tpu_custom_call.1} parent=5 // pred_region
        %s385 = ssub.s32 %s24, 1
        %s386 = sand.u32 %s58, 1
        %s387 = scalar_lea.sflag [#allocation9], %s386
        %s388 = sand.u32 %s58, 1
        %s389 = smul.addr %s388, 8
        %s390 = scalar_lea.vmem [#allocation8], %s389
        // Predicated region
        $region49: #{tpu_custom_call.1} parent=47 // pred_check
          %p391 = pneg %p71
        $region50: #{tpu_custom_call.1} parent=47 // pred_check_branch
          %393 = sbr.rel (%p391) target = $region52
        $region51: #{tpu_custom_call.1} parent=47 // pred_region
          %394 = dma.done %s387, 128
        $region52: #{tpu_custom_call.1} parent=47 // pred_fallthru
          _
        %s395 = sand.u32 %s29, 1
        %s396 = scalar_lea.sflag [#allocation12], %s395
        %s397 = sand.u32 %s90, 1
        %s398 = smul.addr %s397, 8
        %s399 = scalar_lea.vmem [#allocation11], %s398
        // Predicated region
        $region53: #{tpu_custom_call.1} parent=47 // pred_check
          %p400 = pneg %p103
        $region54: #{tpu_custom_call.1} parent=47 // pred_check_branch
          %402 = sbr.rel (%p400) target = $region56
        $region55: #{tpu_custom_call.1} parent=47 // pred_region
          %403 = dma.done %s396, 128
        $region56: #{tpu_custom_call.1} parent=47 // pred_fallthru
          _
        %s404 = sand.u32 %s29, 1
        %s405 = scalar_lea.sflag [#allocation12], %s404
        %s406 = sand.u32 %s122, 1
        %s407 = smul.addr %s406, 8
        %s408 = scalar_lea.vmem [#allocation13], %s407
        // Predicated region
        $region57: #{tpu_custom_call.1} parent=47 // pred_check
          %p409 = pneg %p135
        $region58: #{tpu_custom_call.1} parent=47 // pred_check_branch
          %411 = sbr.rel (%p409) target = $region60
        $region59: #{tpu_custom_call.1} parent=47 // pred_region
          %412 = dma.done %s405, 128
        $region60: #{tpu_custom_call.1} parent=47 // pred_fallthru
          _
        // Predicated region
        $region61: #{tpu_custom_call.1} parent=47 // pred_check
          %p413 = pneg %p156
        $region62: #{tpu_custom_call.1} parent=47 // pred_check_branch
          %415 = sbr.rel (%p413) target = $region64
        $region63: #{tpu_custom_call.1} parent=47 // pred_region
          %416 = dma.done [#allocation15], 512
        $region64: #{tpu_custom_call.1} parent=47 // pred_fallthru
          _
        // Predicated region
        $region65: #{tpu_custom_call.1} parent=47 // pred_check
          %p417 = pneg %p177
        $region66: #{tpu_custom_call.1} parent=47 // pred_check_branch
          %419 = sbr.rel (%p417) target = $region68
        $region67: #{tpu_custom_call.1} parent=47 // pred_region
          %420 = dma.done [#allocation15], 512
        $region68: #{tpu_custom_call.1} parent=47 // pred_fallthru
          _
        // Predicated region
        $region69: #{tpu_custom_call.1} parent=47 // pred_check
          %p421 = pneg %p198
        $region70: #{tpu_custom_call.1} parent=47 // pred_check_branch
          %423 = sbr.rel (%p421) target = $region72
        $region71: #{tpu_custom_call.1} parent=47 // pred_region
          %424 = dma.done [#allocation18], 512
        $region72: #{tpu_custom_call.1} parent=47 // pred_fallthru
          _
        // Predicated region
        $region73: #{tpu_custom_call.1} parent=47 // pred_check
          %p425 = pneg %p219
        $region74: #{tpu_custom_call.1} parent=47 // pred_check_branch
          %427 = sbr.rel (%p425) target = $region76
        $region75: #{tpu_custom_call.1} parent=47 // pred_region
          %428 = dma.done [#allocation18], 512
        $region76: #{tpu_custom_call.1} parent=47 // pred_fallthru
          _
        %s429 = sand.u32 %s58, 1
        %s430 = scalar_lea.sflag [#allocation9], %s429
        %s431 = sand.u32 %s58, 1
        %s432 = smul.addr %s431, 8
        %s433 = scalar_lea.vmem [#allocation8], %s432
        %p434 = pneg %p71
        %p435 = pneg %p68
        %s436 = sand.u32 %s29, 1
        %s437 = scalar_lea.sflag [#allocation12], %s436
        %s438 = sand.u32 %s90, 1
        %s439 = smul.addr %s438, 8
        %s440 = scalar_lea.vmem [#allocation11], %s439
        %p441 = pneg %p103
        %p442 = pneg %p100
        %s443 = sand.u32 %s29, 1
        %s444 = scalar_lea.sflag [#allocation12], %s443
        %s445 = sand.u32 %s122, 1
        %s446 = smul.addr %s445, 8
        %s447 = scalar_lea.vmem [#allocation13], %s446
        %p448 = pneg %p135
        %p449 = pneg %p132
        %p450 = pneg %p156
        %p451 = pneg %p153
        %p452 = pneg %p177
        %p453 = pneg %p174
        %p454 = pneg %p198
        %p455 = pneg %p195
        %p456 = pneg %p219
        %p457 = pneg %p216
        %p458 = pneg %p247
        %p459 = pneg %p244
        %s460 = sand.u32 %s234, 1
        %s461 = scalar_lea.sflag [#allocation10], %s460
        %s462 = sand.u32 %s234, 1
        %s463 = smul.addr %s462, 8
        %s464 = scalar_lea.vmem [#allocation20], %s463
        %s465 = sadd.s32 %s34, %s35
        %p466 = scmp.eq.s32.totalorder %s35, 0
        %s467 = scalar_select %p466, %s36, 0
        %s468 = sadd.s32 %s34, %s467
        %p469 = scmp.eq.s32.totalorder %s35, 0
        %s470 = scalar_select %p469, %s36, 0
        %s471 = sadd.s32 %s34, %s470
        %s472 = sadd.s32 %s34, %s35
        %s473 = smul.u32 %s36, 8
        %p474 = scmp.eq.s32.totalorder %s35, 0
        // Predicated region
        $region77: #{tpu_custom_call.1} parent=47 // pred_check
          %p475 = pneg %p474
        $region78: #{tpu_custom_call.1} parent=47 // pred_check_branch
          %477 = sbr.rel (%p475) target = $region80
        $region79: #{tpu_custom_call.1} parent=47 // pred_region
          %v478 = vld [vmem:[%s399] sm:$0xff]
          %v479 = vld [vmem:[#allocation16] sm:$0xff]
          %v480 = vld [vmem:[#allocation16 + $0x8] sm:$0xff]
          %v481 = vld [vmem:[#allocation16 + $0x10] sm:$0xff]
          %v482 = vld [vmem:[#allocation16 + $0x18] sm:$0xff]
          %vm483 = vcmask 261120
          %v485 = vsel %vm483, %v478, 0
          %487 = vmatprep.subr.mxu0 0.0
          %488 = vmatpush1.msra.mxu0 %v479
          %489 = vmatprep.subr.mxu0 0.0
          %490 = vmatpush1.msra.mxu0 %v480
          %491 = vmatprep.subr.mxu0 0.0
          %492 = vmatpush1.msra.mxu0 %v481
          %493 = vmatprep.subr.mxu0 0.0
          %494 = vmatpush1.msra.mxu0 %v482
          %495 = vmatprep.subr.mxu0 0.0
          %496 = vmatpush1.msra.mxu0 0.0
          %497 = vmatprep.subr.mxu0 0.0
          %498 = vmatpush1.msra.mxu0 0.0
          %499 = vmatprep.subr.mxu0 0.0
          %500 = vmatpush1.msra.mxu0 0.0
          %501 = vmatprep.subr.mxu0 0.0
          %502 = vmatpush1.msra.mxu0 0.0
          %503 = vmatprep.subr.mxu0 0.0
          %504 = vmatpush1.msra.mxu0 0.0
          %505 = vmatprep.subr.mxu0 0.0
          %506 = vmatpush1.msra.mxu0 0.0
          %507 = vmatprep.subr.mxu0 0.0
          %508 = vmatpush1.msra.mxu0 0.0
          %509 = vmatprep.subr.mxu0 0.0
          %510 = vmatpush1.msra.mxu0 0.0
          %511 = vmatprep.subr.mxu0 0.0
          %512 = vmatpush1.msra.mxu0 0.0
          %513 = vmatprep.subr.mxu0 0.0
          %514 = vmatpush1.msra.mxu0 0.0
          %515 = vmatprep.subr.mxu0 0.0
          %516 = vmatpush1.msra.mxu0 0.0
          %517 = vmatprep.subr.mxu0 0.0
          %518 = vmatpush1.msra.mxu0 0.0
          %519 = vmatprep.subr.mxu0 0.0
          %520 = vmatpush1.msra.mxu0 0.0
          %521 = vmatprep.subr.mxu0 0.0
          %522 = vmatpush1.msra.mxu0 0.0
          %523 = vmatprep.subr.mxu0 0.0
          %524 = vmatpush1.msra.mxu0 0.0
          %525 = vmatprep.subr.mxu0 0.0
          %526 = vmatpush1.msra.mxu0 0.0
          %527 = vmatprep.subr.mxu0 0.0
          %528 = vmatpush1.msra.mxu0 0.0
          %529 = vmatprep.subr.mxu0 0.0
          %530 = vmatpush1.msra.mxu0 0.0
          %531 = vmatprep.subr.mxu0 0.0
          %532 = vmatpush1.msra.mxu0 0.0
          %533 = vmatprep.subr.mxu0 0.0
          %534 = vmatpush1.msra.mxu0 0.0
          %535 = vmatprep.subr.mxu0 0.0
          %536 = vmatpush1.msra.mxu0 0.0
          %537 = vmatprep.subr.mxu0 0.0
          %538 = vmatpush1.msra.mxu0 0.0
          %539 = vmatprep.subr.mxu0 0.0
          %540 = vmatpush1.msra.mxu0 0.0
          %541 = vmatprep.subr.mxu0 0.0
          %542 = vmatpush1.msra.mxu0 0.0
          %543 = vmatprep.subr.mxu0 0.0
          %544 = vmatpush1.msra.mxu0 0.0
          %545 = vmatprep.subr.mxu0 0.0
          %546 = vmatpush1.msra.mxu0 0.0
          %547 = vmatprep.subr.mxu0 0.0
          %548 = vmatpush1.msra.mxu0 0.0
          %549 = vmatprep.subr.mxu0 0.0
          %550 = vmatpush1.msra.mxu0 0.0
          %551 = vmatprep.mubr.f32.mxu0 0.0
          %552 = vmatmul.mubr.f32.gmra.mrb[0].mxu0 %v485
          %v553 = vpop.f32.mrb[0].mxu0
          %v554 = vadd.f32 0.0, %v553
          %v555 = vpop.f32.mrb[0].mxu0
          %556 = vdwg.mxu0
          %s557 = scalar_lea.vmem [#allocation3], %s473
          %558 = vst.msk [vmem:[%s557] sm:$0xff] %vm483, %v554
          %v559 = vld [vmem:[%s408] sm:$0xff]
          %v560 = vld [vmem:[#allocation17] sm:$0xff]
          %v561 = vld [vmem:[#allocation17 + $0x8] sm:$0xff]
          %v562 = vld [vmem:[#allocation17 + $0x10] sm:$0xff]
          %v563 = vld [vmem:[#allocation17 + $0x18] sm:$0xff]
          %v565 = vsel %vm483, %v559, 0
          %567 = vmatprep.subr.mxu0 0.0
          %568 = vmatpush1.msra.mxu0 %v560
          %569 = vmatprep.subr.mxu0 0.0
          %570 = vmatpush1.msra.mxu0 %v561
          %571 = vmatprep.subr.mxu0 0.0
          %572 = vmatpush1.msra.mxu0 %v562
          %573 = vmatprep.subr.mxu0 0.0
          %574 = vmatpush1.msra.mxu0 %v563
          %575 = vmatprep.subr.mxu0 0.0
          %576 = vmatpush1.msra.mxu0 0.0
          %577 = vmatprep.subr.mxu0 0.0
          %578 = vmatpush1.msra.mxu0 0.0
          %579 = vmatprep.subr.mxu0 0.0
          %580 = vmatpush1.msra.mxu0 0.0
          %581 = vmatprep.subr.mxu0 0.0
          %582 = vmatpush1.msra.mxu0 0.0
          %583 = vmatprep.subr.mxu0 0.0
          %584 = vmatpush1.msra.mxu0 0.0
          %585 = vmatprep.subr.mxu0 0.0
          %586 = vmatpush1.msra.mxu0 0.0
          %587 = vmatprep.subr.mxu0 0.0
          %588 = vmatpush1.msra.mxu0 0.0
          %589 = vmatprep.subr.mxu0 0.0
          %590 = vmatpush1.msra.mxu0 0.0
          %591 = vmatprep.subr.mxu0 0.0
          %592 = vmatpush1.msra.mxu0 0.0
          %593 = vmatprep.subr.mxu0 0.0
          %594 = vmatpush1.msra.mxu0 0.0
          %595 = vmatprep.subr.mxu0 0.0
          %596 = vmatpush1.msra.mxu0 0.0
          %597 = vmatprep.subr.mxu0 0.0
          %598 = vmatpush1.msra.mxu0 0.0
          %599 = vmatprep.subr.mxu0 0.0
          %600 = vmatpush1.msra.mxu0 0.0
          %601 = vmatprep.subr.mxu0 0.0
          %602 = vmatpush1.msra.mxu0 0.0
          %603 = vmatprep.subr.mxu0 0.0
          %604 = vmatpush1.msra.mxu0 0.0
          %605 = vmatprep.subr.mxu0 0.0
          %606 = vmatpush1.msra.mxu0 0.0
          %607 = vmatprep.subr.mxu0 0.0
          %608 = vmatpush1.msra.mxu0 0.0
          %609 = vmatprep.subr.mxu0 0.0
          %610 = vmatpush1.msra.mxu0 0.0
          %611 = vmatprep.subr.mxu0 0.0
          %612 = vmatpush1.msra.mxu0 0.0
          %613 = vmatprep.subr.mxu0 0.0
          %614 = vmatpush1.msra.mxu0 0.0
          %615 = vmatprep.subr.mxu0 0.0
          %616 = vmatpush1.msra.mxu0 0.0
          %617 = vmatprep.subr.mxu0 0.0
          %618 = vmatpush1.msra.mxu0 0.0
          %619 = vmatprep.subr.mxu0 0.0
          %620 = vmatpush1.msra.mxu0 0.0
          %621 = vmatprep.subr.mxu0 0.0
          %622 = vmatpush1.msra.mxu0 0.0
          %623 = vmatprep.subr.mxu0 0.0
          %624 = vmatpush1.msra.mxu0 0.0
          %625 = vmatprep.subr.mxu0 0.0
          %626 = vmatpush1.msra.mxu0 0.0
          %627 = vmatprep.subr.mxu0 0.0
          %628 = vmatpush1.msra.mxu0 0.0
          %629 = vmatprep.subr.mxu0 0.0
          %630 = vmatpush1.msra.mxu0 0.0
          %631 = vmatprep.mubr.f32.mxu0 0.0
          %632 = vmatmul.mubr.f32.gmra.mrb[0].mxu0 %v565
          %v633 = vpop.f32.mrb[0].mxu0
          %v634 = vadd.f32 0.0, %v633
          %v635 = vpop.f32.mrb[0].mxu0
          %636 = vdwg.mxu0
          %s637 = scalar_lea.vmem [#allocation4], %s473
          %638 = vst.msk [vmem:[%s637] sm:$0xff] %vm483, %v634
        $region80: #{tpu_custom_call.1} parent=47 // pred_fallthru
          _
        %p639 = scmp.eq.s32.totalorder %s36, 0
        // Predicated region
        $region81: #{tpu_custom_call.1} parent=47 // pred_check
          %p640 = pneg %p639
        $region82: #{tpu_custom_call.1} parent=47 // pred_check_branch
          %642 = sbr.rel (%p640) target = $region84
        $region83: #{tpu_custom_call.1} parent=47 // pred_region
          %v643 = vld [vmem:[%s390] sm:$0xff]
          %v644 = vld [vmem:[#allocation14] sm:$0xff]
          %v645 = vld [vmem:[#allocation14 + $0x8] sm:$0xff]
          %v646 = vld [vmem:[#allocation14 + $0x10] sm:$0xff]
          %v647 = vld [vmem:[#allocation14 + $0x18] sm:$0xff]
          %vm648 = vcmask 261120
          %v650 = vsel %vm648, %v643, 0
          %652 = vmatprep.subr.mxu0 0.0
          %653 = vmatpush1.msra.mxu0 %v644
          %654 = vmatprep.subr.mxu0 0.0
          %655 = vmatpush1.msra.mxu0 %v645
          %656 = vmatprep.subr.mxu0 0.0
          %657 = vmatpush1.msra.mxu0 %v646
          %658 = vmatprep.subr.mxu0 0.0
          %659 = vmatpush1.msra.mxu0 %v647
          %660 = vmatprep.subr.mxu0 0.0
          %661 = vmatpush1.msra.mxu0 0.0
          %662 = vmatprep.subr.mxu0 0.0
          %663 = vmatpush1.msra.mxu0 0.0
          %664 = vmatprep.subr.mxu0 0.0
          %665 = vmatpush1.msra.mxu0 0.0
          %666 = vmatprep.subr.mxu0 0.0
          %667 = vmatpush1.msra.mxu0 0.0
          %668 = vmatprep.subr.mxu0 0.0
          %669 = vmatpush1.msra.mxu0 0.0
          %670 = vmatprep.subr.mxu0 0.0
          %671 = vmatpush1.msra.mxu0 0.0
          %672 = vmatprep.subr.mxu0 0.0
          %673 = vmatpush1.msra.mxu0 0.0
          %674 = vmatprep.subr.mxu0 0.0
          %675 = vmatpush1.msra.mxu0 0.0
          %676 = vmatprep.subr.mxu0 0.0
          %677 = vmatpush1.msra.mxu0 0.0
          %678 = vmatprep.subr.mxu0 0.0
          %679 = vmatpush1.msra.mxu0 0.0
          %680 = vmatprep.subr.mxu0 0.0
          %681 = vmatpush1.msra.mxu0 0.0
          %682 = vmatprep.subr.mxu0 0.0
          %683 = vmatpush1.msra.mxu0 0.0
          %684 = vmatprep.subr.mxu0 0.0
          %685 = vmatpush1.msra.mxu0 0.0
          %686 = vmatprep.subr.mxu0 0.0
          %687 = vmatpush1.msra.mxu0 0.0
          %688 = vmatprep.subr.mxu0 0.0
          %689 = vmatpush1.msra.mxu0 0.0
          %690 = vmatprep.subr.mxu0 0.0
          %691 = vmatpush1.msra.mxu0 0.0
          %692 = vmatprep.subr.mxu0 0.0
          %693 = vmatpush1.msra.mxu0 0.0
          %694 = vmatprep.subr.mxu0 0.0
          %695 = vmatpush1.msra.mxu0 0.0
          %696 = vmatprep.subr.mxu0 0.0
          %697 = vmatpush1.msra.mxu0 0.0
          %698 = vmatprep.subr.mxu0 0.0
          %699 = vmatpush1.msra.mxu0 0.0
          %700 = vmatprep.subr.mxu0 0.0
          %701 = vmatpush1.msra.mxu0 0.0
          %702 = vmatprep.subr.mxu0 0.0
          %703 = vmatpush1.msra.mxu0 0.0
          %704 = vmatprep.subr.mxu0 0.0
          %705 = vmatpush1.msra.mxu0 0.0
          %706 = vmatprep.subr.mxu0 0.0
          %707 = vmatpush1.msra.mxu0 0.0
          %708 = vmatprep.subr.mxu0 0.0
          %709 = vmatpush1.msra.mxu0 0.0
          %710 = vmatprep.subr.mxu0 0.0
          %711 = vmatpush1.msra.mxu0 0.0
          %712 = vmatprep.subr.mxu0 0.0
          %713 = vmatpush1.msra.mxu0 0.0
          %714 = vmatprep.subr.mxu0 0.0
          %715 = vmatpush1.msra.mxu0 0.0
          %716 = vmatprep.mubr.f32.mxu0 0.0
          %717 = vmatmul.mubr.f32.gmra.mrb[0].mxu0 %v650
          %v718 = vpop.f32.mrb[0].mxu0
          %v719 = vadd.f32 0.0, %v718
          %v720 = vpop.f32.mrb[0].mxu0
          %721 = vdwg.mxu0
          %722 = vst.msk [vmem:[#allocation2] sm:$0xff] %vm648, %v719
          %723 = vst.msk [vmem:[#allocation5] sm:$0xff] %vm648, 0.0
          %vm724 = vcmask 31744
          %725 = vst.msk [vmem:[#allocation6] sm:$0xff] %vm724, -inf
          %726 = vst.msk [vmem:[#allocation7] sm:$0xff] %vm724, 0.0
        $region84: #{tpu_custom_call.1} parent=47 // pred_fallthru
          _
        %v727 = vld [vmem:[#allocation2] sm:$0xff]
        %s728 = scalar_lea.vmem [#allocation3], %s473
        %v729 = vld [vmem:[%s728] sm:$0xff]
        %s730 = scalar_lea.vmem [#allocation4], %s473
        %v731 = vld [vmem:[%s730] sm:$0xff]
        %vm732 = vcmask 64512
        %v734 = vsel %vm732, %v727, 0
        %v737 = vsel %vm732, %v729, 0
        %739 = vmatprep.subr.mxu0 0.0
        %740 = vmatpush1.xpose.msra.mxu0 %v737
        %741 = vmatprep.subr.mxu0 0.0
        %742 = vmatpush1.xpose.msra.mxu0 0.0
        %743 = vmatprep.subr.mxu0 0.0
        %744 = vmatpush1.xpose.msra.mxu0 0.0
        %745 = vmatprep.subr.mxu0 0.0
        %746 = vmatpush1.xpose.msra.mxu0 0.0
        %747 = vmatprep.subr.mxu0 0.0
        %748 = vmatpush1.xpose.msra.mxu0 0.0
        %749 = vmatprep.subr.mxu0 0.0
        %750 = vmatpush1.xpose.msra.mxu0 0.0
        %751 = vmatprep.subr.mxu0 0.0
        %752 = vmatpush1.xpose.msra.mxu0 0.0
        %753 = vmatprep.subr.mxu0 0.0
        %754 = vmatpush1.xpose.msra.mxu0 0.0
        %755 = vmatprep.subr.mxu0 0.0
        %756 = vmatpush1.xpose.msra.mxu0 0.0
        %757 = vmatprep.subr.mxu0 0.0
        %758 = vmatpush1.xpose.msra.mxu0 0.0
        %759 = vmatprep.subr.mxu0 0.0
        %760 = vmatpush1.xpose.msra.mxu0 0.0
        %761 = vmatprep.subr.mxu0 0.0
        %762 = vmatpush1.xpose.msra.mxu0 0.0
        %763 = vmatprep.subr.mxu0 0.0
        %764 = vmatpush1.xpose.msra.mxu0 0.0
        %765 = vmatprep.subr.mxu0 0.0
        %766 = vmatpush1.xpose.msra.mxu0 0.0
        %767 = vmatprep.subr.mxu0 0.0
        %768 = vmatpush1.xpose.msra.mxu0 0.0
        %769 = vmatprep.subr.mxu0 0.0
        %770 = vmatpush1.xpose.msra.mxu0 0.0
        %771 = vmatprep.subr.mxu0 0.0
        %772 = vmatpush1.xpose.msra.mxu0 0.0
        %773 = vmatprep.subr.mxu0 0.0
        %774 = vmatpush1.xpose.msra.mxu0 0.0
        %775 = vmatprep.subr.mxu0 0.0
        %776 = vmatpush1.xpose.msra.mxu0 0.0
        %777 = vmatprep.subr.mxu0 0.0
        %778 = vmatpush1.xpose.msra.mxu0 0.0
        %779 = vmatprep.subr.mxu0 0.0
        %780 = vmatpush1.xpose.msra.mxu0 0.0
        %781 = vmatprep.subr.mxu0 0.0
        %782 = vmatpush1.xpose.msra.mxu0 0.0
        %783 = vmatprep.subr.mxu0 0.0
        %784 = vmatpush1.xpose.msra.mxu0 0.0
        %785 = vmatprep.subr.mxu0 0.0
        %786 = vmatpush1.xpose.msra.mxu0 0.0
        %787 = vmatprep.subr.mxu0 0.0
        %788 = vmatpush1.xpose.msra.mxu0 0.0
        %789 = vmatprep.subr.mxu0 0.0
        %790 = vmatpush1.xpose.msra.mxu0 0.0
        %791 = vmatprep.subr.mxu0 0.0
        %792 = vmatpush1.xpose.msra.mxu0 0.0
        %793 = vmatprep.subr.mxu0 0.0
        %794 = vmatpush1.xpose.msra.mxu0 0.0
        %795 = vmatprep.subr.mxu0 0.0
        %796 = vmatpush1.xpose.msra.mxu0 0.0
        %797 = vmatprep.subr.mxu0 0.0
        %798 = vmatpush1.xpose.msra.mxu0 0.0
        %799 = vmatprep.subr.mxu0 0.0
        %800 = vmatpush1.xpose.msra.mxu0 0.0
        %801 = vmatprep.subr.mxu0 0.0
        %802 = vmatpush1.xpose.msra.mxu0 0.0
        %803 = vmatprep.mubr.f32.mxu0 0.0
        %804 = vmatmul.mubr.f32.gmra.mrb[0].mxu0 %v734
        %v805 = vpop.f32.mrb[0].mxu0
        %v806 = vadd.f32 0.0, %v805
        %v807 = vpop.f32.mrb[0].mxu0
        %808 = vdwg.mxu0
        %v809 = vld [vmem:[#allocation6] sm:$0xff]
        %v810 = vld [vmem:[#allocation7] sm:$0xff]
        %v811 = vsel %vm732, %v806, -inf
        %812 = vmax.xlane.f32.xlu0 %v811
        %v813 = vpop.xlane.xlu0 %812
        %v814 = vmax.f32 %v809, %v813
        %v815 = vsub.f32 %v809, %v814
        %v816 = vmul.f32 %v815, 1.442695
        %v817 = vpow.pop %v816
        %819 = vset.pattern.permute.xlu0 0
        %820 = vperm.xlu0 %819, %v814
        %v821 = vpop.permute.xlu0 %820
        %v823 = vsub.f32 %v806, %v821
        %v824 = vmul.f32 %v823, 1.442695
        %v825 = vpow.pop %v824
        %v826 = vmul.f32 %v817, %v810
        %v827 = vsel %vm732, %v825, 0.0
        %828 = vadd.xlane.f32.xlu0 %v827
        %v829 = vpop.xlane.xlu0 %828
        %v830 = vadd.f32 %v826, %v829
        %vm831 = vcmask 7168
        %832 = vst.msk [vmem:[#allocation7] sm:$0xff] %vm831, %v830
        %v833 = vld [vmem:[#allocation5] sm:$0xff]
        %835 = vset.pattern.permute.xlu0 0
        %836 = vperm.xlu0 %835, %v817
        %v837 = vpop.permute.xlu0 %836
        %v839 = vmul.f32 %v837, %v833
        %v841 = vsel %vm732, %v825, 0
        %843 = vmatprep.subr.mxu0 0.0
        %844 = vmatpush1.msra.mxu0 %v731
        %845 = vmatprep.subr.mxu0 0.0
        %846 = vmatpush1.msra.mxu0 0.0
        %847 = vmatprep.subr.mxu0 0.0
        %848 = vmatpush1.msra.mxu0 0.0
        %849 = vmatprep.subr.mxu0 0.0
        %850 = vmatpush1.msra.mxu0 0.0
        %851 = vmatprep.subr.mxu0 0.0
        %852 = vmatpush1.msra.mxu0 0.0
        %853 = vmatprep.subr.mxu0 0.0
        %854 = vmatpush1.msra.mxu0 0.0
        %855 = vmatprep.subr.mxu0 0.0
        %856 = vmatpush1.msra.mxu0 0.0
        %857 = vmatprep.subr.mxu0 0.0
        %858 = vmatpush1.msra.mxu0 0.0
        %859 = vmatprep.subr.mxu0 0.0
        %860 = vmatpush1.msra.mxu0 0.0
        %861 = vmatprep.subr.mxu0 0.0
        %862 = vmatpush1.msra.mxu0 0.0
        %863 = vmatprep.subr.mxu0 0.0
        %864 = vmatpush1.msra.mxu0 0.0
        %865 = vmatprep.subr.mxu0 0.0
        %866 = vmatpush1.msra.mxu0 0.0
        %867 = vmatprep.subr.mxu0 0.0
        %868 = vmatpush1.msra.mxu0 0.0
        %869 = vmatprep.subr.mxu0 0.0
        %870 = vmatpush1.msra.mxu0 0.0
        %871 = vmatprep.subr.mxu0 0.0
        %872 = vmatpush1.msra.mxu0 0.0
        %873 = vmatprep.subr.mxu0 0.0
        %874 = vmatpush1.msra.mxu0 0.0
        %875 = vmatprep.subr.mxu0 0.0
        %876 = vmatpush1.msra.mxu0 0.0
        %877 = vmatprep.subr.mxu0 0.0
        %878 = vmatpush1.msra.mxu0 0.0
        %879 = vmatprep.subr.mxu0 0.0
        %880 = vmatpush1.msra.mxu0 0.0
        %881 = vmatprep.subr.mxu0 0.0
        %882 = vmatpush1.msra.mxu0 0.0
        %883 = vmatprep.subr.mxu0 0.0
        %884 = vmatpush1.msra.mxu0 0.0
        %885 = vmatprep.subr.mxu0 0.0
        %886 = vmatpush1.msra.mxu0 0.0
        %887 = vmatprep.subr.mxu0 0.0
        %888 = vmatpush1.msra.mxu0 0.0
        %889 = vmatprep.subr.mxu0 0.0
        %890 = vmatpush1.msra.mxu0 0.0
        %891 = vmatprep.subr.mxu0 0.0
        %892 = vmatpush1.msra.mxu0 0.0
        %893 = vmatprep.subr.mxu0 0.0
        %894 = vmatpush1.msra.mxu0 0.0
        %895 = vmatprep.subr.mxu0 0.0
        %896 = vmatpush1.msra.mxu0 0.0
        %897 = vmatprep.subr.mxu0 0.0
        %898 = vmatpush1.msra.mxu0 0.0
        %899 = vmatprep.subr.mxu0 0.0
        %900 = vmatpush1.msra.mxu0 0.0
        %901 = vmatprep.subr.mxu0 0.0
        %902 = vmatpush1.msra.mxu0 0.0
        %903 = vmatprep.subr.mxu0 0.0
        %904 = vmatpush1.msra.mxu0 0.0
        %905 = vmatprep.subr.mxu0 0.0
        %906 = vmatpush1.msra.mxu0 0.0
        %907 = vmatprep.mubr.f32.mxu0 0.0
        %908 = vmatmul.mubr.f32.gmra.mrb[0].mxu0 %v841
        %v909 = vpop.f32.mrb[0].mxu0
        %v910 = vadd.f32 0.0, %v909
        %v911 = vpop.f32.mrb[0].mxu0
        %912 = vdwg.mxu0
        %v913 = vadd.f32 %v839, %v910
        %914 = vst.msk [vmem:[#allocation5] sm:$0xff] %vm732, %v913
        %915 = vst.msk [vmem:[#allocation6] sm:$0xff] %vm831, %v814
        %916 = vrot.lane.b32.xlu0 %v727, 120
        %v917 = vpop.permute.xlu0 %916
        %918 = vrot.lane.b32.xlu0 %v729, 120
        %v919 = vpop.permute.xlu0 %918
        %v920 = vsel %vm732, %v917, 0
        %v922 = vsel %vm732, %v919, 0
        %924 = vmatprep.subr.mxu0 0.0
        %925 = vmatpush1.xpose.msra.mxu0 %v922
        %926 = vmatprep.subr.mxu0 0.0
        %927 = vmatpush1.xpose.msra.mxu0 0.0
        %928 = vmatprep.subr.mxu0 0.0
        %929 = vmatpush1.xpose.msra.mxu0 0.0
        %930 = vmatprep.subr.mxu0 0.0
        %931 = vmatpush1.xpose.msra.mxu0 0.0
        %932 = vmatprep.subr.mxu0 0.0
        %933 = vmatpush1.xpose.msra.mxu0 0.0
        %934 = vmatprep.subr.mxu0 0.0
        %935 = vmatpush1.xpose.msra.mxu0 0.0
        %936 = vmatprep.subr.mxu0 0.0
        %937 = vmatpush1.xpose.msra.mxu0 0.0
        %938 = vmatprep.subr.mxu0 0.0
        %939 = vmatpush1.xpose.msra.mxu0 0.0
        %940 = vmatprep.subr.mxu0 0.0
        %941 = vmatpush1.xpose.msra.mxu0 0.0
        %942 = vmatprep.subr.mxu0 0.0
        %943 = vmatpush1.xpose.msra.mxu0 0.0
        %944 = vmatprep.subr.mxu0 0.0
        %945 = vmatpush1.xpose.msra.mxu0 0.0
        %946 = vmatprep.subr.mxu0 0.0
        %947 = vmatpush1.xpose.msra.mxu0 0.0
        %948 = vmatprep.subr.mxu0 0.0
        %949 = vmatpush1.xpose.msra.mxu0 0.0
        %950 = vmatprep.subr.mxu0 0.0
        %951 = vmatpush1.xpose.msra.mxu0 0.0
        %952 = vmatprep.subr.mxu0 0.0
        %953 = vmatpush1.xpose.msra.mxu0 0.0
        %954 = vmatprep.subr.mxu0 0.0
        %955 = vmatpush1.xpose.msra.mxu0 0.0
        %956 = vmatprep.subr.mxu0 0.0
        %957 = vmatpush1.xpose.msra.mxu0 0.0
        %958 = vmatprep.subr.mxu0 0.0
        %959 = vmatpush1.xpose.msra.mxu0 0.0
        %960 = vmatprep.subr.mxu0 0.0
        %961 = vmatpush1.xpose.msra.mxu0 0.0
        %962 = vmatprep.subr.mxu0 0.0
        %963 = vmatpush1.xpose.msra.mxu0 0.0
        %964 = vmatprep.subr.mxu0 0.0
        %965 = vmatpush1.xpose.msra.mxu0 0.0
        %966 = vmatprep.subr.mxu0 0.0
        %967 = vmatpush1.xpose.msra.mxu0 0.0
        %968 = vmatprep.subr.mxu0 0.0
        %969 = vmatpush1.xpose.msra.mxu0 0.0
        %970 = vmatprep.subr.mxu0 0.0
        %971 = vmatpush1.xpose.msra.mxu0 0.0
        %972 = vmatprep.subr.mxu0 0.0
        %973 = vmatpush1.xpose.msra.mxu0 0.0
        %974 = vmatprep.subr.mxu0 0.0
        %975 = vmatpush1.xpose.msra.mxu0 0.0
        %976 = vmatprep.subr.mxu0 0.0
        %977 = vmatpush1.xpose.msra.mxu0 0.0
        %978 = vmatprep.subr.mxu0 0.0
        %979 = vmatpush1.xpose.msra.mxu0 0.0
        %980 = vmatprep.subr.mxu0 0.0
        %981 = vmatpush1.xpose.msra.mxu0 0.0
        %982 = vmatprep.subr.mxu0 0.0
        %983 = vmatpush1.xpose.msra.mxu0 0.0
        %984 = vmatprep.subr.mxu0 0.0
        %985 = vmatpush1.xpose.msra.mxu0 0.0
        %986 = vmatprep.subr.mxu0 0.0
        %987 = vmatpush1.xpose.msra.mxu0 0.0
        %988 = vmatprep.mubr.f32.mxu0 0.0
        %989 = vmatmul.mubr.f32.gmra.mrb[0].mxu0 %v920
        %v990 = vpop.f32.mrb[0].mxu0
        %v991 = vadd.f32 0.0, %v990
        %v992 = vpop.f32.mrb[0].mxu0
        %993 = vdwg.mxu0
        %v994 = vld [vmem:[#allocation6] sm:$0xff]
        %v995 = vld [vmem:[#allocation7] sm:$0xff]
        %v996 = vsel %vm732, %v991, -inf
        %997 = vmax.xlane.f32.xlu0 %v996
        %v998 = vpop.xlane.xlu0 %997
        %v999 = vmax.f32 %v994, %v998
        %v1000 = vsub.f32 %v994, %v999
        %v1001 = vmul.f32 %v1000, 1.442695
        %v1002 = vpow.pop %v1001
        %1004 = vset.pattern.permute.xlu0 1
        %1005 = vperm.xlu0 %1004, %v999
        %v1006 = vpop.permute.xlu0 %1005
        %v1008 = vsub.f32 %v991, %v1006
        %v1009 = vmul.f32 %v1008, 1.442695
        %v1010 = vpow.pop %v1009
        %v1011 = vmul.f32 %v1002, %v995
        %v1012 = vsel %vm732, %v1010, 0.0
        %1013 = vadd.xlane.f32.xlu0 %v1012
        %v1014 = vpop.xlane.xlu0 %1013
        %v1015 = vadd.f32 %v1011, %v1014
        %vm1016 = vcmask 15368
        %1017 = vst.msk [vmem:[#allocation7] sm:$0xff] %vm1016, %v1015
        %v1018 = vld [vmem:[#allocation5] sm:$0xff]
        %1020 = vset.pattern.permute.xlu0 1
        %1021 = vperm.xlu0 %1020, %v1002
        %v1022 = vpop.permute.xlu0 %1021
        %v1024 = vmul.f32 %v1022, %v1018
        %1026 = vrot.lane.b32.xlu0 %v731, 120
        %v1027 = vpop.permute.xlu0 %1026
        %v1030 = vsel %vm732, %v1010, 0
        %1032 = vmatprep.subr.mxu0 0.0
        %1033 = vmatpush1.msra.mxu0 %v1027
        %1034 = vmatprep.subr.mxu0 0.0
        %1035 = vmatpush1.msra.mxu0 0.0
        %1036 = vmatprep.subr.mxu0 0.0
        %1037 = vmatpush1.msra.mxu0 0.0
        %1038 = vmatprep.subr.mxu0 0.0
        %1039 = vmatpush1.msra.mxu0 0.0
        %1040 = vmatprep.subr.mxu0 0.0
        %1041 = vmatpush1.msra.mxu0 0.0
        %1042 = vmatprep.subr.mxu0 0.0
        %1043 = vmatpush1.msra.mxu0 0.0
        %1044 = vmatprep.subr.mxu0 0.0
        %1045 = vmatpush1.msra.mxu0 0.0
        %1046 = vmatprep.subr.mxu0 0.0
        %1047 = vmatpush1.msra.mxu0 0.0
        %1048 = vmatprep.subr.mxu0 0.0
        %1049 = vmatpush1.msra.mxu0 0.0
        %1050 = vmatprep.subr.mxu0 0.0
        %1051 = vmatpush1.msra.mxu0 0.0
        %1052 = vmatprep.subr.mxu0 0.0
        %1053 = vmatpush1.msra.mxu0 0.0
        %1054 = vmatprep.subr.mxu0 0.0
        %1055 = vmatpush1.msra.mxu0 0.0
        %1056 = vmatprep.subr.mxu0 0.0
        %1057 = vmatpush1.msra.mxu0 0.0
        %1058 = vmatprep.subr.mxu0 0.0
        %1059 = vmatpush1.msra.mxu0 0.0
        %1060 = vmatprep.subr.mxu0 0.0
        %1061 = vmatpush1.msra.mxu0 0.0
        %1062 = vmatprep.subr.mxu0 0.0
        %1063 = vmatpush1.msra.mxu0 0.0
        %1064 = vmatprep.subr.mxu0 0.0
        %1065 = vmatpush1.msra.mxu0 0.0
        %1066 = vmatprep.subr.mxu0 0.0
        %1067 = vmatpush1.msra.mxu0 0.0
        %1068 = vmatprep.subr.mxu0 0.0
        %1069 = vmatpush1.msra.mxu0 0.0
        %1070 = vmatprep.subr.mxu0 0.0
        %1071 = vmatpush1.msra.mxu0 0.0
        %1072 = vmatprep.subr.mxu0 0.0
        %1073 = vmatpush1.msra.mxu0 0.0
        %1074 = vmatprep.subr.mxu0 0.0
        %1075 = vmatpush1.msra.mxu0 0.0
        %1076 = vmatprep.subr.mxu0 0.0
        %1077 = vmatpush1.msra.mxu0 0.0
        %1078 = vmatprep.subr.mxu0 0.0
        %1079 = vmatpush1.msra.mxu0 0.0
        %1080 = vmatprep.subr.mxu0 0.0
        %1081 = vmatpush1.msra.mxu0 0.0
        %1082 = vmatprep.subr.mxu0 0.0
        %1083 = vmatpush1.msra.mxu0 0.0
        %1084 = vmatprep.subr.mxu0 0.0
        %1085 = vmatpush1.msra.mxu0 0.0
        %1086 = vmatprep.subr.mxu0 0.0
        %1087 = vmatpush1.msra.mxu0 0.0
        %1088 = vmatprep.subr.mxu0 0.0
        %1089 = vmatpush1.msra.mxu0 0.0
        %1090 = vmatprep.subr.mxu0 0.0
        %1091 = vmatpush1.msra.mxu0 0.0
        %1092 = vmatprep.subr.mxu0 0.0
        %1093 = vmatpush1.msra.mxu0 0.0
        %1094 = vmatprep.subr.mxu0 0.0
        %1095 = vmatpush1.msra.mxu0 0.0
        %1096 = vmatprep.mubr.f32.mxu0 0.0
        %1097 = vmatmul.mubr.f32.gmra.mrb[0].mxu0 %v1030
        %v1098 = vpop.f32.mrb[0].mxu0
        %v1099 = vadd.f32 0.0, %v1098
        %v1100 = vpop.f32.mrb[0].mxu0
        %1101 = vdwg.mxu0
        %1103 = vrot.lane.b32.xlu0 %v1099, 8
        %v1104 = vpop.permute.xlu0 %1103
        %v1106 = vadd.f32 %v1024, %v1104
        %vm1107 = vcmask 130112
        %1108 = vst.msk [vmem:[#allocation5] sm:$0xff] %vm1107, %v1106
        %1109 = vst.msk [vmem:[#allocation6] sm:$0xff] %vm1016, %v999
        %1110 = vrot.lane.b32.xlu0 %v727, 112
        %v1111 = vpop.permute.xlu0 %1110
        %1112 = vrot.lane.b32.xlu0 %v729, 112
        %v1113 = vpop.permute.xlu0 %1112
        %v1114 = vsel %vm732, %v1111, 0
        %v1116 = vsel %vm732, %v1113, 0
        %1118 = vmatprep.subr.mxu0 0.0
        %1119 = vmatpush1.xpose.msra.mxu0 %v1116
        %1120 = vmatprep.subr.mxu0 0.0
        %1121 = vmatpush1.xpose.msra.mxu0 0.0
        %1122 = vmatprep.subr.mxu0 0.0
        %1123 = vmatpush1.xpose.msra.mxu0 0.0
        %1124 = vmatprep.subr.mxu0 0.0
        %1125 = vmatpush1.xpose.msra.mxu0 0.0
        %1126 = vmatprep.subr.mxu0 0.0
        %1127 = vmatpush1.xpose.msra.mxu0 0.0
        %1128 = vmatprep.subr.mxu0 0.0
        %1129 = vmatpush1.xpose.msra.mxu0 0.0
        %1130 = vmatprep.subr.mxu0 0.0
        %1131 = vmatpush1.xpose.msra.mxu0 0.0
        %1132 = vmatprep.subr.mxu0 0.0
        %1133 = vmatpush1.xpose.msra.mxu0 0.0
        %1134 = vmatprep.subr.mxu0 0.0
        %1135 = vmatpush1.xpose.msra.mxu0 0.0
        %1136 = vmatprep.subr.mxu0 0.0
        %1137 = vmatpush1.xpose.msra.mxu0 0.0
        %1138 = vmatprep.subr.mxu0 0.0
        %1139 = vmatpush1.xpose.msra.mxu0 0.0
        %1140 = vmatprep.subr.mxu0 0.0
        %1141 = vmatpush1.xpose.msra.mxu0 0.0
        %1142 = vmatprep.subr.mxu0 0.0
        %1143 = vmatpush1.xpose.msra.mxu0 0.0
        %1144 = vmatprep.subr.mxu0 0.0
        %1145 = vmatpush1.xpose.msra.mxu0 0.0
        %1146 = vmatprep.subr.mxu0 0.0
        %1147 = vmatpush1.xpose.msra.mxu0 0.0
        %1148 = vmatprep.subr.mxu0 0.0
        %1149 = vmatpush1.xpose.msra.mxu0 0.0
        %1150 = vmatprep.subr.mxu0 0.0
        %1151 = vmatpush1.xpose.msra.mxu0 0.0
        %1152 = vmatprep.subr.mxu0 0.0
        %1153 = vmatpush1.xpose.msra.mxu0 0.0
        %1154 = vmatprep.subr.mxu0 0.0
        %1155 = vmatpush1.xpose.msra.mxu0 0.0
        %1156 = vmatprep.subr.mxu0 0.0
        %1157 = vmatpush1.xpose.msra.mxu0 0.0
        %1158 = vmatprep.subr.mxu0 0.0
        %1159 = vmatpush1.xpose.msra.mxu0 0.0
        %1160 = vmatprep.subr.mxu0 0.0
        %1161 = vmatpush1.xpose.msra.mxu0 0.0
        %1162 = vmatprep.subr.mxu0 0.0
        %1163 = vmatpush1.xpose.msra.mxu0 0.0
        %1164 = vmatprep.subr.mxu0 0.0
        %1165 = vmatpush1.xpose.msra.mxu0 0.0
        %1166 = vmatprep.subr.mxu0 0.0
        %1167 = vmatpush1.xpose.msra.mxu0 0.0
        %1168 = vmatprep.subr.mxu0 0.0
        %1169 = vmatpush1.xpose.msra.mxu0 0.0
        %1170 = vmatprep.subr.mxu0 0.0
        %1171 = vmatpush1.xpose.msra.mxu0 0.0
        %1172 = vmatprep.subr.mxu0 0.0
        %1173 = vmatpush1.xpose.msra.mxu0 0.0
        %1174 = vmatprep.subr.mxu0 0.0
        %1175 = vmatpush1.xpose.msra.mxu0 0.0
        %1176 = vmatprep.subr.mxu0 0.0
        %1177 = vmatpush1.xpose.msra.mxu0 0.0
        %1178 = vmatprep.subr.mxu0 0.0
        %1179 = vmatpush1.xpose.msra.mxu0 0.0
        %1180 = vmatprep.subr.mxu0 0.0
        %1181 = vmatpush1.xpose.msra.mxu0 0.0
        %1182 = vmatprep.mubr.f32.mxu0 0.0
        %1183 = vmatmul.mubr.f32.gmra.mrb[0].mxu0 %v1114
        %v1184 = vpop.f32.mrb[0].mxu0
        %v1185 = vadd.f32 0.0, %v1184
        %v1186 = vpop.f32.mrb[0].mxu0
        %1187 = vdwg.mxu0
        %v1188 = vld [vmem:[#allocation6] sm:$0xff]
        %v1189 = vld [vmem:[#allocation7] sm:$0xff]
        %v1190 = vsel %vm732, %v1185, -inf
        %1191 = vmax.xlane.f32.xlu0 %v1190
        %v1192 = vpop.xlane.xlu0 %1191
        %v1193 = vmax.f32 %v1188, %v1192
        %v1194 = vsub.f32 %v1188, %v1193
        %v1195 = vmul.f32 %v1194, 1.442695
        %v1196 = vpow.pop %v1195
        %1198 = vset.pattern.permute.xlu0 2
        %1199 = vperm.xlu0 %1198, %v1193
        %v1200 = vpop.permute.xlu0 %1199
        %v1202 = vsub.f32 %v1185, %v1200
        %v1203 = vmul.f32 %v1202, 1.442695
        %v1204 = vpow.pop %v1203
        %v1205 = vmul.f32 %v1196, %v1189
        %v1206 = vsel %vm732, %v1204, 0.0
        %1207 = vadd.xlane.f32.xlu0 %v1206
        %v1208 = vpop.xlane.xlu0 %1207
        %v1209 = vadd.f32 %v1205, %v1208
        %vm1210 = vcmask 23568
        %1211 = vst.msk [vmem:[#allocation7] sm:$0xff] %vm1210, %v1209
        %v1212 = vld [vmem:[#allocation5] sm:$0xff]
        %1214 = vset.pattern.permute.xlu0 2
        %1215 = vperm.xlu0 %1214, %v1196
        %v1216 = vpop.permute.xlu0 %1215
        %v1218 = vmul.f32 %v1216, %v1212
        %1219 = vrot.lane.b32.xlu0 %v731, 112
        %v1220 = vpop.permute.xlu0 %1219
        %v1223 = vsel %vm732, %v1204, 0
        %1225 = vmatprep.subr.mxu0 0.0
        %1226 = vmatpush1.msra.mxu0 %v1220
        %1227 = vmatprep.subr.mxu0 0.0
        %1228 = vmatpush1.msra.mxu0 0.0
        %1229 = vmatprep.subr.mxu0 0.0
        %1230 = vmatpush1.msra.mxu0 0.0
        %1231 = vmatprep.subr.mxu0 0.0
        %1232 = vmatpush1.msra.mxu0 0.0
        %1233 = vmatprep.subr.mxu0 0.0
        %1234 = vmatpush1.msra.mxu0 0.0
        %1235 = vmatprep.subr.mxu0 0.0
        %1236 = vmatpush1.msra.mxu0 0.0
        %1237 = vmatprep.subr.mxu0 0.0
        %1238 = vmatpush1.msra.mxu0 0.0
        %1239 = vmatprep.subr.mxu0 0.0
        %1240 = vmatpush1.msra.mxu0 0.0
        %1241 = vmatprep.subr.mxu0 0.0
        %1242 = vmatpush1.msra.mxu0 0.0
        %1243 = vmatprep.subr.mxu0 0.0
        %1244 = vmatpush1.msra.mxu0 0.0
        %1245 = vmatprep.subr.mxu0 0.0
        %1246 = vmatpush1.msra.mxu0 0.0
        %1247 = vmatprep.subr.mxu0 0.0
        %1248 = vmatpush1.msra.mxu0 0.0
        %1249 = vmatprep.subr.mxu0 0.0
        %1250 = vmatpush1.msra.mxu0 0.0
        %1251 = vmatprep.subr.mxu0 0.0
        %1252 = vmatpush1.msra.mxu0 0.0
        %1253 = vmatprep.subr.mxu0 0.0
        %1254 = vmatpush1.msra.mxu0 0.0
        %1255 = vmatprep.subr.mxu0 0.0
        %1256 = vmatpush1.msra.mxu0 0.0
        %1257 = vmatprep.subr.mxu0 0.0
        %1258 = vmatpush1.msra.mxu0 0.0
        %1259 = vmatprep.subr.mxu0 0.0
        %1260 = vmatpush1.msra.mxu0 0.0
        %1261 = vmatprep.subr.mxu0 0.0
        %1262 = vmatpush1.msra.mxu0 0.0
        %1263 = vmatprep.subr.mxu0 0.0
        %1264 = vmatpush1.msra.mxu0 0.0
        %1265 = vmatprep.subr.mxu0 0.0
        %1266 = vmatpush1.msra.mxu0 0.0
        %1267 = vmatprep.subr.mxu0 0.0
        %1268 = vmatpush1.msra.mxu0 0.0
        %1269 = vmatprep.subr.mxu0 0.0
        %1270 = vmatpush1.msra.mxu0 0.0
        %1271 = vmatprep.subr.mxu0 0.0
        %1272 = vmatpush1.msra.mxu0 0.0
        %1273 = vmatprep.subr.mxu0 0.0
        %1274 = vmatpush1.msra.mxu0 0.0
        %1275 = vmatprep.subr.mxu0 0.0
        %1276 = vmatpush1.msra.mxu0 0.0
        %1277 = vmatprep.subr.mxu0 0.0
        %1278 = vmatpush1.msra.mxu0 0.0
        %1279 = vmatprep.subr.mxu0 0.0
        %1280 = vmatpush1.msra.mxu0 0.0
        %1281 = vmatprep.subr.mxu0 0.0
        %1282 = vmatpush1.msra.mxu0 0.0
        %1283 = vmatprep.subr.mxu0 0.0
        %1284 = vmatpush1.msra.mxu0 0.0
        %1285 = vmatprep.subr.mxu0 0.0
        %1286 = vmatpush1.msra.mxu0 0.0
        %1287 = vmatprep.subr.mxu0 0.0
        %1288 = vmatpush1.msra.mxu0 0.0
        %1289 = vmatprep.mubr.f32.mxu0 0.0
        %1290 = vmatmul.mubr.f32.gmra.mrb[0].mxu0 %v1223
        %v1291 = vpop.f32.mrb[0].mxu0
        %v1292 = vadd.f32 0.0, %v1291
        %v1293 = vpop.f32.mrb[0].mxu0
        %1294 = vdwg.mxu0
        %1296 = vrot.lane.b32.xlu0 %v1292, 16
        %v1297 = vpop.permute.xlu0 %1296
        %v1299 = vadd.f32 %v1218, %v1297
        %vm1300 = vcmask 195712
        %1301 = vst.msk [vmem:[#allocation5] sm:$0xff] %vm1300, %v1299
        %1302 = vst.msk [vmem:[#allocation6] sm:$0xff] %vm1210, %v1193
        %1303 = vrot.lane.b32.xlu0 %v727, 104
        %v1304 = vpop.permute.xlu0 %1303
        %1305 = vrot.lane.b32.xlu0 %v729, 104
        %v1306 = vpop.permute.xlu0 %1305
        %v1307 = vsel %vm732, %v1304, 0
        %v1309 = vsel %vm732, %v1306, 0
        %1311 = vmatprep.subr.mxu0 0.0
        %1312 = vmatpush1.xpose.msra.mxu0 %v1309
        %1313 = vmatprep.subr.mxu0 0.0
        %1314 = vmatpush1.xpose.msra.mxu0 0.0
        %1315 = vmatprep.subr.mxu0 0.0
        %1316 = vmatpush1.xpose.msra.mxu0 0.0
        %1317 = vmatprep.subr.mxu0 0.0
        %1318 = vmatpush1.xpose.msra.mxu0 0.0
        %1319 = vmatprep.subr.mxu0 0.0
        %1320 = vmatpush1.xpose.msra.mxu0 0.0
        %1321 = vmatprep.subr.mxu0 0.0
        %1322 = vmatpush1.xpose.msra.mxu0 0.0
        %1323 = vmatprep.subr.mxu0 0.0
        %1324 = vmatpush1.xpose.msra.mxu0 0.0
        %1325 = vmatprep.subr.mxu0 0.0
        %1326 = vmatpush1.xpose.msra.mxu0 0.0
        %1327 = vmatprep.subr.mxu0 0.0
        %1328 = vmatpush1.xpose.msra.mxu0 0.0
        %1329 = vmatprep.subr.mxu0 0.0
        %1330 = vmatpush1.xpose.msra.mxu0 0.0
        %1331 = vmatprep.subr.mxu0 0.0
        %1332 = vmatpush1.xpose.msra.mxu0 0.0
        %1333 = vmatprep.subr.mxu0 0.0
        %1334 = vmatpush1.xpose.msra.mxu0 0.0
        %1335 = vmatprep.subr.mxu0 0.0
        %1336 = vmatpush1.xpose.msra.mxu0 0.0
        %1337 = vmatprep.subr.mxu0 0.0
        %1338 = vmatpush1.xpose.msra.mxu0 0.0
        %1339 = vmatprep.subr.mxu0 0.0
        %1340 = vmatpush1.xpose.msra.mxu0 0.0
        %1341 = vmatprep.subr.mxu0 0.0
        %1342 = vmatpush1.xpose.msra.mxu0 0.0
        %1343 = vmatprep.subr.mxu0 0.0
        %1344 = vmatpush1.xpose.msra.mxu0 0.0
        %1345 = vmatprep.subr.mxu0 0.0
        %1346 = vmatpush1.xpose.msra.mxu0 0.0
        %1347 = vmatprep.subr.mxu0 0.0
        %1348 = vmatpush1.xpose.msra.mxu0 0.0
        %1349 = vmatprep.subr.mxu0 0.0
        %1350 = vmatpush1.xpose.msra.mxu0 0.0
        %1351 = vmatprep.subr.mxu0 0.0
        %1352 = vmatpush1.xpose.msra.mxu0 0.0
        %1353 = vmatprep.subr.mxu0 0.0
        %1354 = vmatpush1.xpose.msra.mxu0 0.0
        %1355 = vmatprep.subr.mxu0 0.0
        %1356 = vmatpush1.xpose.msra.mxu0 0.0
        %1357 = vmatprep.subr.mxu0 0.0
        %1358 = vmatpush1.xpose.msra.mxu0 0.0
        %1359 = vmatprep.subr.mxu0 0.0
        %1360 = vmatpush1.xpose.msra.mxu0 0.0
        %1361 = vmatprep.subr.mxu0 0.0
        %1362 = vmatpush1.xpose.msra.mxu0 0.0
        %1363 = vmatprep.subr.mxu0 0.0
        %1364 = vmatpush1.xpose.msra.mxu0 0.0
        %1365 = vmatprep.subr.mxu0 0.0
        %1366 = vmatpush1.xpose.msra.mxu0 0.0
        %1367 = vmatprep.subr.mxu0 0.0
        %1368 = vmatpush1.xpose.msra.mxu0 0.0
        %1369 = vmatprep.subr.mxu0 0.0
        %1370 = vmatpush1.xpose.msra.mxu0 0.0
        %1371 = vmatprep.subr.mxu0 0.0
        %1372 = vmatpush1.xpose.msra.mxu0 0.0
        %1373 = vmatprep.subr.mxu0 0.0
        %1374 = vmatpush1.xpose.msra.mxu0 0.0
        %1375 = vmatprep.mubr.f32.mxu0 0.0
        %1376 = vmatmul.mubr.f32.gmra.mrb[0].mxu0 %v1307
        %v1377 = vpop.f32.mrb[0].mxu0
        %v1378 = vadd.f32 0.0, %v1377
        %v1379 = vpop.f32.mrb[0].mxu0
        %1380 = vdwg.mxu0
        %v1381 = vld [vmem:[#allocation6] sm:$0xff]
        %v1382 = vld [vmem:[#allocation7] sm:$0xff]
        %v1383 = vsel %vm732, %v1378, -inf
        %1384 = vmax.xlane.f32.xlu0 %v1383
        %v1385 = vpop.xlane.xlu0 %1384
        %v1386 = vmax.f32 %v1381, %v1385
        %v1387 = vsub.f32 %v1381, %v1386
        %v1388 = vmul.f32 %v1387, 1.442695
        %v1389 = vpow.pop %v1388
        %1391 = vset.pattern.permute.xlu0 3
        %1392 = vperm.xlu0 %1391, %v1386
        %v1393 = vpop.permute.xlu0 %1392
        %v1395 = vsub.f32 %v1378, %v1393
        %v1396 = vmul.f32 %v1395, 1.442695
        %v1397 = vpow.pop %v1396
        %v1398 = vmul.f32 %v1389, %v1382
        %v1399 = vsel %vm732, %v1397, 0.0
        %1400 = vadd.xlane.f32.xlu0 %v1399
        %v1401 = vpop.xlane.xlu0 %1400
        %v1402 = vadd.f32 %v1398, %v1401
        %vm1403 = vcmask 31768
        %1404 = vst.msk [vmem:[#allocation7] sm:$0xff] %vm1403, %v1402
        %v1405 = vld [vmem:[#allocation5] sm:$0xff]
        %1407 = vset.pattern.permute.xlu0 3
        %1408 = vperm.xlu0 %1407, %v1389
        %v1409 = vpop.permute.xlu0 %1408
        %v1411 = vmul.f32 %v1409, %v1405
        %1412 = vrot.lane.b32.xlu0 %v731, 104
        %v1413 = vpop.permute.xlu0 %1412
        %v1416 = vsel %vm732, %v1397, 0
        %1418 = vmatprep.subr.mxu0 0.0
        %1419 = vmatpush1.msra.mxu0 %v1413
        %1420 = vmatprep.subr.mxu0 0.0
        %1421 = vmatpush1.msra.mxu0 0.0
        %1422 = vmatprep.subr.mxu0 0.0
        %1423 = vmatpush1.msra.mxu0 0.0
        %1424 = vmatprep.subr.mxu0 0.0
        %1425 = vmatpush1.msra.mxu0 0.0
        %1426 = vmatprep.subr.mxu0 0.0
        %1427 = vmatpush1.msra.mxu0 0.0
        %1428 = vmatprep.subr.mxu0 0.0
        %1429 = vmatpush1.msra.mxu0 0.0
        %1430 = vmatprep.subr.mxu0 0.0
        %1431 = vmatpush1.msra.mxu0 0.0
        %1432 = vmatprep.subr.mxu0 0.0
        %1433 = vmatpush1.msra.mxu0 0.0
        %1434 = vmatprep.subr.mxu0 0.0
        %1435 = vmatpush1.msra.mxu0 0.0
        %1436 = vmatprep.subr.mxu0 0.0
        %1437 = vmatpush1.msra.mxu0 0.0
        %1438 = vmatprep.subr.mxu0 0.0
        %1439 = vmatpush1.msra.mxu0 0.0
        %1440 = vmatprep.subr.mxu0 0.0
        %1441 = vmatpush1.msra.mxu0 0.0
        %1442 = vmatprep.subr.mxu0 0.0
        %1443 = vmatpush1.msra.mxu0 0.0
        %1444 = vmatprep.subr.mxu0 0.0
        %1445 = vmatpush1.msra.mxu0 0.0
        %1446 = vmatprep.subr.mxu0 0.0
        %1447 = vmatpush1.msra.mxu0 0.0
        %1448 = vmatprep.subr.mxu0 0.0
        %1449 = vmatpush1.msra.mxu0 0.0
        %1450 = vmatprep.subr.mxu0 0.0
        %1451 = vmatpush1.msra.mxu0 0.0
        %1452 = vmatprep.subr.mxu0 0.0
        %1453 = vmatpush1.msra.mxu0 0.0
        %1454 = vmatprep.subr.mxu0 0.0
        %1455 = vmatpush1.msra.mxu0 0.0
        %1456 = vmatprep.subr.mxu0 0.0
        %1457 = vmatpush1.msra.mxu0 0.0
        %1458 = vmatprep.subr.mxu0 0.0
        %1459 = vmatpush1.msra.mxu0 0.0
        %1460 = vmatprep.subr.mxu0 0.0
        %1461 = vmatpush1.msra.mxu0 0.0
        %1462 = vmatprep.subr.mxu0 0.0
        %1463 = vmatpush1.msra.mxu0 0.0
        %1464 = vmatprep.subr.mxu0 0.0
        %1465 = vmatpush1.msra.mxu0 0.0
        %1466 = vmatprep.subr.mxu0 0.0
        %1467 = vmatpush1.msra.mxu0 0.0
        %1468 = vmatprep.subr.mxu0 0.0
        %1469 = vmatpush1.msra.mxu0 0.0
        %1470 = vmatprep.subr.mxu0 0.0
        %1471 = vmatpush1.msra.mxu0 0.0
        %1472 = vmatprep.subr.mxu0 0.0
        %1473 = vmatpush1.msra.mxu0 0.0
        %1474 = vmatprep.subr.mxu0 0.0
        %1475 = vmatpush1.msra.mxu0 0.0
        %1476 = vmatprep.subr.mxu0 0.0
        %1477 = vmatpush1.msra.mxu0 0.0
        %1478 = vmatprep.subr.mxu0 0.0
        %1479 = vmatpush1.msra.mxu0 0.0
        %1480 = vmatprep.subr.mxu0 0.0
        %1481 = vmatpush1.msra.mxu0 0.0
        %1482 = vmatprep.mubr.f32.mxu0 0.0
        %1483 = vmatmul.mubr.f32.gmra.mrb[0].mxu0 %v1416
        %v1484 = vpop.f32.mrb[0].mxu0
        %v1485 = vadd.f32 0.0, %v1484
        %v1486 = vpop.f32.mrb[0].mxu0
        %1487 = vdwg.mxu0
        %1489 = vrot.lane.b32.xlu0 %v1485, 24
        %v1490 = vpop.permute.xlu0 %1489
        %v1492 = vadd.f32 %v1411, %v1490
        %vm1493 = vcmask 261312
        %1494 = vst.msk [vmem:[#allocation5] sm:$0xff] %vm1493, %v1492
        %1495 = vst.msk [vmem:[#allocation6] sm:$0xff] %vm1403, %v1386
        // Predicated region
        $region85: #{tpu_custom_call.1} parent=47 // pred_check
          %p1496 = pneg %p639
        $region86: #{tpu_custom_call.1} parent=47 // pred_check_branch
          %1498 = sbr.rel (%p1496) target = $region88
        $region87: #{tpu_custom_call.1} parent=47 // pred_region
          %v1499 = vld [vmem:[#allocation7] sm:$0xff]
          %v1500 = vrcp.pop %v1499
          %v1501 = vmul.f32 %v1499, %v1500
          %v1502 = vsub.f32 2.0, %v1501
          %v1503 = vmul.f32 %v1500, %v1502
          %v1504 = vld [vmem:[#allocation5] sm:$0xff]
          %1506 = vset.pattern.permute.xlu0 0
          %1507 = vperm.xlu0 %1506, %v1503
          %v1508 = vpop.permute.xlu0 %1507
          %v1510 = vmul.f32 %v1504, %v1508
          %1511 = vst.msk [vmem:[#allocation5] sm:$0xff] %vm732, %v1510
          %v1512 = vld [vmem:[#allocation5] sm:$0xff]
          %1513 = vset.pattern.permute.xlu0 1
          %1514 = vperm.xlu0 %1513, %v1503
          %v1515 = vpop.permute.xlu0 %1514
          %v1517 = vmul.f32 %v1512, %v1515
          %1518 = vst.msk [vmem:[#allocation5] sm:$0xff] %vm1107, %v1517
          %v1519 = vld [vmem:[#allocation5] sm:$0xff]
          %1520 = vset.pattern.permute.xlu0 2
          %1521 = vperm.xlu0 %1520, %v1503
          %v1522 = vpop.permute.xlu0 %1521
          %v1524 = vmul.f32 %v1519, %v1522
          %1525 = vst.msk [vmem:[#allocation5] sm:$0xff] %vm1300, %v1524
          %v1526 = vld [vmem:[#allocation5] sm:$0xff]
          %1527 = vset.pattern.permute.xlu0 3
          %1528 = vperm.xlu0 %1527, %v1503
          %v1529 = vpop.permute.xlu0 %1528
          %v1531 = vmul.f32 %v1526, %v1529
          %1532 = vst.msk [vmem:[#allocation5] sm:$0xff] %vm1493, %v1531
          %v1533 = vld [vmem:[#allocation5] sm:$0xff]
          %v1534 = vld [vmem:[#allocation19] sm:$0xff]
          %v1535 = vld [vmem:[#allocation19 + $0x8] sm:$0xff]
          %v1536 = vld [vmem:[#allocation19 + $0x10] sm:$0xff]
          %v1537 = vld [vmem:[#allocation19 + $0x18] sm:$0xff]
          %v1538 = vld [vmem:[%s390] sm:$0xff]
          %vm1539 = vcmask 261120
          %v1541 = vsel %vm1539, %v1533, 0
          %1543 = vmatprep.subr.mxu0 0.0
          %1544 = vmatpush1.msra.mxu0 %v1534
          %1545 = vmatprep.subr.mxu0 0.0
          %1546 = vmatpush1.msra.mxu0 %v1535
          %1547 = vmatprep.subr.mxu0 0.0
          %1548 = vmatpush1.msra.mxu0 %v1536
          %1549 = vmatprep.subr.mxu0 0.0
          %1550 = vmatpush1.msra.mxu0 %v1537
          %1551 = vmatprep.subr.mxu0 0.0
          %1552 = vmatpush1.msra.mxu0 0.0
          %1553 = vmatprep.subr.mxu0 0.0
          %1554 = vmatpush1.msra.mxu0 0.0
          %1555 = vmatprep.subr.mxu0 0.0
          %1556 = vmatpush1.msra.mxu0 0.0
          %1557 = vmatprep.subr.mxu0 0.0
          %1558 = vmatpush1.msra.mxu0 0.0
          %1559 = vmatprep.subr.mxu0 0.0
          %1560 = vmatpush1.msra.mxu0 0.0
          %1561 = vmatprep.subr.mxu0 0.0
          %1562 = vmatpush1.msra.mxu0 0.0
          %1563 = vmatprep.subr.mxu0 0.0
          %1564 = vmatpush1.msra.mxu0 0.0
          %1565 = vmatprep.subr.mxu0 0.0
          %1566 = vmatpush1.msra.mxu0 0.0
          %1567 = vmatprep.subr.mxu0 0.0
          %1568 = vmatpush1.msra.mxu0 0.0
          %1569 = vmatprep.subr.mxu0 0.0
          %1570 = vmatpush1.msra.mxu0 0.0
          %1571 = vmatprep.subr.mxu0 0.0
          %1572 = vmatpush1.msra.mxu0 0.0
          %1573 = vmatprep.subr.mxu0 0.0
          %1574 = vmatpush1.msra.mxu0 0.0
          %1575 = vmatprep.subr.mxu0 0.0
          %1576 = vmatpush1.msra.mxu0 0.0
          %1577 = vmatprep.subr.mxu0 0.0
          %1578 = vmatpush1.msra.mxu0 0.0
          %1579 = vmatprep.subr.mxu0 0.0
          %1580 = vmatpush1.msra.mxu0 0.0
          %1581 = vmatprep.subr.mxu0 0.0
          %1582 = vmatpush1.msra.mxu0 0.0
          %1583 = vmatprep.subr.mxu0 0.0
          %1584 = vmatpush1.msra.mxu0 0.0
          %1585 = vmatprep.subr.mxu0 0.0
          %1586 = vmatpush1.msra.mxu0 0.0
          %1587 = vmatprep.subr.mxu0 0.0
          %1588 = vmatpush1.msra.mxu0 0.0
          %1589 = vmatprep.subr.mxu0 0.0
          %1590 = vmatpush1.msra.mxu0 0.0
          %1591 = vmatprep.subr.mxu0 0.0
          %1592 = vmatpush1.msra.mxu0 0.0
          %1593 = vmatprep.subr.mxu0 0.0
          %1594 = vmatpush1.msra.mxu0 0.0
          %1595 = vmatprep.subr.mxu0 0.0
          %1596 = vmatpush1.msra.mxu0 0.0
          %1597 = vmatprep.subr.mxu0 0.0
          %1598 = vmatpush1.msra.mxu0 0.0
          %1599 = vmatprep.subr.mxu0 0.0
          %1600 = vmatpush1.msra.mxu0 0.0
          %1601 = vmatprep.subr.mxu0 0.0
          %1602 = vmatpush1.msra.mxu0 0.0
          %1603 = vmatprep.subr.mxu0 0.0
          %1604 = vmatpush1.msra.mxu0 0.0
          %1605 = vmatprep.subr.mxu0 0.0
          %1606 = vmatpush1.msra.mxu0 0.0
          %1607 = vmatprep.mubr.f32.mxu0 0.0
          %1608 = vmatmul.mubr.f32.gmra.mrb[0].mxu0 %v1541
          %v1609 = vpop.f32.mrb[0].mxu0
          %v1610 = vadd.f32 %v1538, %v1609
          %v1611 = vpop.f32.mrb[0].mxu0
          %1612 = vdwg.mxu0
          %1613 = vst.msk [vmem:[%s464] sm:$0xff] %vm1539, %v1610
        $region88: #{tpu_custom_call.1} parent=47 // pred_fallthru
          _
        %s1614 = sand.u32 %s234, 1
        %s1615 = scalar_lea.sflag [#allocation10], %s1614
        %s1616 = sand.u32 %s234, 1
        %s1617 = smul.addr %s1616, 8
        %s1618 = scalar_lea.vmem [#allocation20], %s1617
        // Predicated region
        $region89: #{tpu_custom_call.1} parent=47 // pred_check
          %p1619 = pneg %p244
        $region90: #{tpu_custom_call.1} parent=47 // pred_check_branch
          %1621 = sbr.rel (%p1619) target = $region92
        $region91: #{tpu_custom_call.1} parent=47 // pred_region
          %s1622 = sadd.s32 %s34, %s35
          %s1624 = ssub.s32 128, 128
          %1625 = vsyncadd %s1615, %s1624
          %s1626 = smul.addr %s1622, 128
          %s1627 = scalar_lea.hbm %s7, %s1626
          %s1629 = sshll.u32 %s1618, 4
          %s1630 = int_to_ptr.vmem [resolvable:$true] %s1629
          %1632 = dma.vmem_to_hbm [thread:$0]  %s1630, 128, %s1627, %s1615
        $region92: #{tpu_custom_call.1} parent=47 // pred_fallthru
          _
      $region48: #{tpu_custom_call.1} parent=5 // pred_fallthru
        _
      %p1633 = scmp.le.s32.totalorder 2, %s24
      // Predicated region
      $region93: #{tpu_custom_call.1} parent=5 // pred_check
        %p1634 = pneg %p1633
      $region94: #{tpu_custom_call.1} parent=5 // pred_check_branch
        %1636 = sbr.rel (%p1634) target = $region96
      $region95: #{tpu_custom_call.1} parent=5 // pred_region
        %s1637 = ssub.s32 %s24, 2
        // Predicated region
        $region97: #{tpu_custom_call.1} parent=95 // pred_check
          %p1638 = pneg %p250
        $region98: #{tpu_custom_call.1} parent=95 // pred_check_branch
          %1640 = sbr.rel (%p1638) target = $region100
        $region99: #{tpu_custom_call.1} parent=95 // pred_region
          %s1641 = sand.u32 %s235, 1
          %s1642 = scalar_lea.sflag [#allocation10], %s1641
          %s1643 = sand.u32 %s235, 1
          %s1644 = smul.addr %s1643, 8
          %s1645 = scalar_lea.vmem [#allocation20], %s1644
          %1646 = dma.done %s1642, 128
        $region100: #{tpu_custom_call.1} parent=95 // pred_fallthru
          _
      $region96: #{tpu_custom_call.1} parent=5 // pred_fallthru
        _
    $region6: #{tpu_custom_call.1} parent=1 // loop_footer
      %s28 = sadd.s32 1, %s24
    $region7: #{tpu_custom_call.1} parent=1 // loop_footer_branch
      %23 = sbr.rel target = $region3
    $region8: #{tpu_custom_call.1} parent=1 // loop_exit
      _
    %1647 = vsyncpa [#allocation9], 1
    %s1648 = scalar_lea.sflag [#allocation9], 1
    %1649 = vsyncpa %s1648, 1
    %1650 = vsyncpa [#allocation12], 1
    %s1651 = scalar_lea.sflag [#allocation12], 1
    %1652 = vsyncpa %s1651, 1
    %1653 = vsyncpa [#allocation15], 1
    %1654 = vsyncpa [#allocation18], 1
    %1655 = vsyncpa [#allocation10], 1
    %s1656 = scalar_lea.sflag [#allocation10], 1
    %1657 = vsyncpa %s1656, 1

</llo_original>
